<compile_context>
chip_gen: v6e
topology: v6e:2x2x1
jax: 0.10.0
libtpu: 0.0.40
codegen_flags: <defaults>
</compile_context>

<pallas_src>
import functools
import math

import jax
import jax.numpy as jnp
from jax.experimental import pallas as pl
from jax.experimental.pallas import tpu as pltpu

LANE = 128


def _round_up(x, m):
    return ((x + m - 1) // m) * m


# ----------------------------------------------------------------------------
# GroupNorm helpers: group statistics via a constant group-average matrix (MXU)
# ----------------------------------------------------------------------------

def group_avg_matrix(c_valid, c_pad, groups):
    """A[c1,c2] = 1/Cg if c1,c2 are valid channels of the same group else 0.

    (col_sum @ A) / HW == per-group mean broadcast back to channels; rows and
    columns of zero-padded channels are zero, so padded lanes are excluded
    from the statistics (and stay exactly 0 through GN+SiLU since their
    gamma/beta are 0).
    """
    cg = c_valid // groups
    idx = jnp.arange(c_pad)
    grp = idx // cg
    valid = idx < c_valid
    same = (grp[:, None] == grp[None, :]) & valid[:, None] & valid[None, :]
    return same.astype(jnp.float32) / float(cg)


def _gn_silu(x, gamma, beta, avg_mat, hw):
    """GroupNorm(eps=1e-5) + SiLU on a VMEM-resident (HW, C) f32 tile."""
    inv_hw = 1.0 / float(hw)
    col_sum = jnp.sum(x, axis=0, keepdims=True)                           # (1,C)
    mu = jnp.dot(col_sum, avg_mat, preferred_element_type=jnp.float32) * inv_hw
    d = x - mu
    col_ss = jnp.sum(d * d, axis=0, keepdims=True)
    var = jnp.dot(col_ss, avg_mat, preferred_element_type=jnp.float32) * inv_hw
    y = d * jax.lax.rsqrt(var + 1e-5) * gamma + beta
    return y * jax.nn.sigmoid(y)                                          # SiLU


# ----------------------------------------------------------------------------
# Fused backbone (+ compress) kernel: one image per grid step
# ----------------------------------------------------------------------------

def _backbone_kernel(p_ref, ws_ref, bs_ref, g0g_ref, g0b_ref, a0_ref,
                     wh_ref, bh_ref, g1g_ref, g1b_ref, a1_ref,
                     wc_ref, bc_ref, o_ref, *, hw):
    p = p_ref[0]                                                          # (HW,Kp) bf16
    h = jnp.dot(p, ws_ref[...], preferred_element_type=jnp.float32) + bs_ref[...]
    h = _gn_silu(h, g0g_ref[...], g0b_ref[...], a0_ref[...], hw)
    h = jnp.dot(h.astype(jnp.bfloat16), wh_ref[...],
                preferred_element_type=jnp.float32) + bh_ref[...]
    h = _gn_silu(h, g1g_ref[...], g1b_ref[...], a1_ref[...], hw)
    feat = jnp.mean(h, axis=0, keepdims=True)                             # (1,F)
    out = jnp.dot(feat.astype(jnp.bfloat16), wc_ref[...],
                  preferred_element_type=jnp.float32) + bc_ref[...]       # (1,D)
    o_ref[0] = out


def pallas_backbone_compress(patches, bb, w_comp, b_comp):
    """patches: (N, HW, Kp) bf16 -> features (N, D) f32 (backbone + compress)."""
    N, HW, Kp = patches.shape
    C0p = bb["w_stem"].shape[1]
    F = bb["w_head"].shape[1]
    D = w_comp.shape[1]

    flops = (2 * N * HW * (Kp * C0p + C0p * F)
             + 2 * N * (C0p * C0p + F * F + F * D))
    transc = N * HW * (C0p + F)
    bytes_acc = (N * HW * Kp * 2 + N * D * 4
                 + 2 * (Kp * C0p + C0p * F + F * D)
                 + 4 * (C0p * C0p + F * F + 2 * C0p + 2 * F + D))

    out = pl.pallas_call(
        functools.partial(_backbone_kernel, hw=HW),
        out_shape=jax.ShapeDtypeStruct((N, 1, D), jnp.float32),
        grid=(N,),
        in_specs=[
            pl.BlockSpec((1, HW, Kp), lambda n: (n, 0, 0)),
            pl.BlockSpec((Kp, C0p), lambda n: (0, 0)),
            pl.BlockSpec((1, C0p), lambda n: (0, 0)),
            pl.BlockSpec((1, C0p), lambda n: (0, 0)),
            pl.BlockSpec((1, C0p), lambda n: (0, 0)),
            pl.BlockSpec((C0p, C0p), lambda n: (0, 0)),
            pl.BlockSpec((C0p, F), lambda n: (0, 0)),
            pl.BlockSpec((1, F), lambda n: (0, 0)),
            pl.BlockSpec((1, F), lambda n: (0, 0)),
            pl.BlockSpec((1, F), lambda n: (0, 0)),
            pl.BlockSpec((F, F), lambda n: (0, 0)),
            pl.BlockSpec((F, D), lambda n: (0, 0)),
            pl.BlockSpec((1, D), lambda n: (0, 0)),
        ],
        out_specs=pl.BlockSpec((1, 1, D), lambda n: (n, 0, 0)),
        compiler_params=pltpu.CompilerParams(dimension_semantics=("parallel",)),
        cost_estimate=pl.CostEstimate(flops=flops, transcendentals=transc,
                                      bytes_accessed=bytes_acc),
    )(patches, bb["w_stem"], bb["b_stem"], bb["gn0_g"], bb["gn0_b"], bb["gn0_avg"],
      bb["w_head"], bb["b_head"], bb["gn1_g"], bb["gn1_b"], bb["gn1_avg"],
      w_comp, b_comp)
    return out.reshape(N, D)


# ----------------------------------------------------------------------------
# Fused transformer encoder (all layers) + pooling + classifier kernel
# ----------------------------------------------------------------------------

def _encoder_classifier_kernel(x_ref, pe_ref,
                               ln1g_ref, ln1b_ref, wqkv_ref, bqkv_ref,
                               wo_ref, bo_ref, ln2g_ref, ln2b_ref,
                               wff1_ref, bff1_ref, wff2_ref, bff2_ref,
                               w1_ref, b1_ref, w2_ref, b2_ref, w3_ref, b3_ref,
                               o_ref, *, layers, heads, dhp, scale):
    x = x_ref[0] + pe_ref[0]                                              # (S,D) f32
    S = x.shape[0]

    for l in range(layers):
        # --- MHA block (pre-LN) ---
        mu = jnp.mean(x, axis=-1, keepdims=True)
        var = jnp.mean((x - mu) ** 2, axis=-1, keepdims=True)
        xn = (x - mu) * jax.lax.rsqrt(var + 1e-5) * ln1g_ref[l] + ln1b_ref[l]

        qkv = jnp.dot(xn.astype(jnp.bfloat16), wqkv_ref[l],
                      preferred_element_type=jnp.float32) + bqkv_ref[l]   # (S, H*3*dhp)

        head_outs = []
        for h in range(heads):
            base = h * 3 * dhp                                            # lane-aligned
            q = qkv[:, base:base + dhp]
            k = qkv[:, base + dhp:base + 2 * dhp]
            v = qkv[:, base + 2 * dhp:base + 3 * dhp]
            s = jax.lax.dot_general(
                q.astype(jnp.bfloat16), k.astype(jnp.bfloat16),
                (((1,), (1,)), ((), ())),
                preferred_element_type=jnp.float32) * scale
            m = jnp.max(s, axis=-1, keepdims=True)
            p = jnp.exp(s - m)
            p = p * pl.reciprocal(jnp.sum(p, axis=-1, keepdims=True), approx=True)
            head_outs.append(jnp.dot(p.astype(jnp.bfloat16), v.astype(jnp.bfloat16),
                                     preferred_element_type=jnp.float32))
        attn = jnp.concatenate(head_outs, axis=-1)                        # (S, H*dhp)

        out = jnp.dot(attn.astype(jnp.bfloat16), wo_ref[l],
                      preferred_element_type=jnp.float32) + bo_ref[l]
        x = x + out

        # --- FFN block (pre-LN, gelu) ---
        mu = jnp.mean(x, axis=-1, keepdims=True)
        var = jnp.mean((x - mu) ** 2, axis=-1, keepdims=True)
        xn = (x - mu) * jax.lax.rsqrt(var + 1e-5) * ln2g_ref[l] + ln2b_ref[l]
        hdn = jnp.dot(xn.astype(jnp.bfloat16), wff1_ref[l],
                      preferred_element_type=jnp.float32) + bff1_ref[l]
        hdn = jax.nn.gelu(hdn, approximate=False)
        y = jnp.dot(hdn.astype(jnp.bfloat16), wff2_ref[l],
                    preferred_element_type=jnp.float32) + bff2_ref[l]
        x = x + y

    # --- pooling + fusion + classifier MLP (dropout = identity in eval) ---
    ctx_pooled = jnp.mean(x[:S - 1, :], axis=0, keepdims=True)            # (1,D)
    ref_pooled = x[S - 1:S, :]                                            # (1,D)
    fused = jnp.concatenate([ctx_pooled, ref_pooled], axis=1)             # (1,2D)
    hcls = jnp.dot(fused, w1_ref[...], preferred_element_type=jnp.float32) + b1_ref[...]
    hcls = jnp.maximum(hcls, 0.0)
    hcls = jnp.dot(hcls, w2_ref[...], preferred_element_type=jnp.float32) + b2_ref[...]
    hcls = jnp.maximum(hcls, 0.0)
    logits = jnp.dot(hcls, w3_ref[...], preferred_element_type=jnp.float32) + b3_ref[...]
    o_ref[0] = logits


def pallas_encoder_classifier(joint, params):
    cfg = params["cfg"]
    enc = params["enc"]
    B, S, D = joint.shape
    heads, layers, dhp = cfg["heads"], cfg["layers"], cfg["dhp"]
    dh = D // heads
    Wq = enc["w_qkv"].shape[-1]          # heads * 3 * dhp
    Wor = enc["w_o"].shape[1]            # heads * dhp
    FF = enc["w_ff1"].shape[-1]
    H1 = params["cls_w1"].shape[1]
    H2 = params["cls_w2"].shape[1]
    NC = params["cls_w3"].shape[1]
    F2D = params["cls_w1"].shape[0]

    per_layer = (2 * S * D * Wq + heads * 4 * S * S * dhp
                 + 2 * S * Wor * D + 4 * S * D * FF)
    flops = B * (layers * per_layer + 2 * F2D * H1 + 2 * H1 * H2 + 2 * H2 * NC)
    transc = B * layers * (heads * S * S + S * FF)
    bytes_acc = (B * S * D * 8 + S * D * 4
                 + 2 * layers * (D * Wq + Wor * D + 2 * D * FF)
                 + 4 * (F2D * H1 + H1 * H2 + H2 * NC) + B * NC * 4)

    out = pl.pallas_call(
        functools.partial(_encoder_classifier_kernel, layers=layers, heads=heads,
                          dhp=dhp, scale=1.0 / math.sqrt(dh)),
        out_shape=jax.ShapeDtypeStruct((B, 1, NC), jnp.float32),
        grid=(B,),
        in_specs=[
            pl.BlockSpec((1, S, D), lambda b: (b, 0, 0)),
            pl.BlockSpec((1, S, D), lambda b: (0, 0, 0)),
            pl.BlockSpec((layers, 1, D), lambda b: (0, 0, 0)),
            pl.BlockSpec((layers, 1, D), lambda b: (0, 0, 0)),
            pl.BlockSpec((layers, D, Wq), lambda b: (0, 0, 0)),
            pl.BlockSpec((layers, 1, Wq), lambda b: (0, 0, 0)),
            pl.BlockSpec((layers, Wor, D), lambda b: (0, 0, 0)),
            pl.BlockSpec((layers, 1, D), lambda b: (0, 0, 0)),
            pl.BlockSpec((layers, 1, D), lambda b: (0, 0, 0)),
            pl.BlockSpec((layers, 1, D), lambda b: (0, 0, 0)),
            pl.BlockSpec((layers, D, FF), lambda b: (0, 0, 0)),
            pl.BlockSpec((layers, 1, FF), lambda b: (0, 0, 0)),
            pl.BlockSpec((layers, FF, D), lambda b: (0, 0, 0)),
            pl.BlockSpec((layers, 1, D), lambda b: (0, 0, 0)),
            pl.BlockSpec((F2D, H1), lambda b: (0, 0)),
            pl.BlockSpec((1, H1), lambda b: (0, 0)),
            pl.BlockSpec((H1, H2), lambda b: (0, 0)),
            pl.BlockSpec((1, H2), lambda b: (0, 0)),
            pl.BlockSpec((H2, NC), lambda b: (0, 0)),
            pl.BlockSpec((1, NC), lambda b: (0, 0)),
        ],
        out_specs=pl.BlockSpec((1, 1, NC), lambda b: (b, 0, 0)),
        compiler_params=pltpu.CompilerParams(dimension_semantics=("parallel",)),
        cost_estimate=pl.CostEstimate(flops=flops, transcendentals=transc,
                                      bytes_accessed=bytes_acc),
    )(joint, params["pe"],
      enc["ln1_g"], enc["ln1_b"], enc["w_qkv"], enc["b_qkv"],
      enc["w_o"], enc["b_o"], enc["ln2_g"], enc["ln2_b"],
      enc["w_ff1"], enc["b_ff1"], enc["w_ff2"], enc["b_ff2"],
      params["cls_w1"], params["cls_b1"], params["cls_w2"], params["cls_b2"],
      params["cls_w3"], params["cls_b3"])
    return out.reshape(B, NC)


# ----------------------------------------------------------------------------
# Glue: im2col (packed, bf16), positional encoding, forward
# ----------------------------------------------------------------------------

def im2col_3x3_s2_packed(x_nhwc, kp):
    """3x3 / stride-2 / pad-1 patches -> (N, Ho*Wo, kp) bf16, K zero-padded to kp.

    # TODO(synk): for a real EfficientNet-sized stem, fold the 9-tap expansion
    # into the stem kernel's K accumulation instead of materializing it; at
    # these shapes the packed bf16 patch tensor is a few KB per frame.
    """
    N, H, W, C = x_nhwc.shape
    Ho, Wo = H // 2, W // 2
    xp = jnp.pad(x_nhwc, ((0, 0), (1, 1), (1, 1), (0, 0)))
    cols = []
    for kh in range(3):
        for kw in range(3):
            cols.append(xp[:, kh:kh + 2 * Ho - 1:2, kw:kw + 2 * Wo - 1:2, :])
    p = jnp.concatenate(cols, axis=-1).reshape(N, Ho * Wo, 9 * C)
    if kp > 9 * C:
        p = jnp.pad(p, ((0, 0), (0, 0), (0, kp - 9 * C)))
    return p.astype(jnp.bfloat16)


def sinusoidal_positional_encoding(seq_len, d):
    pos = jnp.arange(seq_len, dtype=jnp.float32)[:, None]
    i = jnp.arange(0, d, 2, dtype=jnp.float32)
    div = jnp.exp(-math.log(10000.0) * i / d)
    ang = pos * div
    pe = jnp.zeros((seq_len, d), jnp.float32)
    pe = pe.at[:, 0::2].set(jnp.sin(ang))
    pe = pe.at[:, 1::2].set(jnp.cos(ang))
    return pe


def forward(params, context_frames, reference_frames):
    """context_frames: (B, Tc, 3, H, W); reference_frames: (B, Tr, 3, H, W)."""
    cfg = params["cfg"]
    B, Tc = context_frames.shape[0], context_frames.shape[1]
    H, W = context_frames.shape[-2], context_frames.shape[-1]
    D = cfg["D"]

    # --- context branch: fused backbone + compress over all B*Tc frames ---
    ctx = context_frames.reshape(B * Tc, 3, H, W).transpose(0, 2, 3, 1)    # NHWC
    ctx_patches = im2col_3x3_s2_packed(ctx, params["ctx_backbone"]["w_stem"].shape[0])
    ctx_feat = pallas_backbone_compress(ctx_patches, params["ctx_backbone"],
                                        params["compress_ctx_w"],
                                        params["compress_ctx_b"])          # (B*Tc, D)
    ctx_feat = ctx_feat.reshape(B, Tc, D)

    # --- reference branch: first & last reference frame stacked on channels ---
    if reference_frames.shape[1] >= 2:
        ref_cat = jnp.concatenate(
            [reference_frames[:, 0], reference_frames[:, -1]], axis=1)     # (B,6,H,W)
    else:
        ref_cat = jnp.concatenate(
            [reference_frames[:, 0], reference_frames[:, 0]], axis=1)
    ref = ref_cat.transpose(0, 2, 3, 1)                                    # NHWC, C=6
    ref_patches = im2col_3x3_s2_packed(ref, params["ref_backbone"]["w_stem"].shape[0])
    ref_feat = pallas_backbone_compress(ref_patches, params["ref_backbone"],
                                        params["compress_ref_w"],
                                        params["compress_ref_b"])          # (B, D)

    # --- joint tokens; PE add + encoder + pooling + classifier fused in 1 kernel ---
    joint = jnp.concatenate([ctx_feat, ref_feat[:, None, :]], axis=1)      # (B,Tc+1,D)
    return pallas_encoder_classifier(joint, params)


# ----------------------------------------------------------------------------
# Deterministic parameter initialization (padded / packed / bf16 once)
# ----------------------------------------------------------------------------

def _xavier_uniform(key, fan_in, fan_out):
    a = math.sqrt(6.0 / (fan_in + fan_out))
    return jax.random.uniform(key, (fan_in, fan_out), jnp.float32, -a, a)


def _pad2d(x, rows, cols):
    return jnp.pad(x, ((0, rows - x.shape[0]), (0, cols - x.shape[1])))


def _make_backbone_params(key, cin, c0, feat):
    k1, k2 = jax.random.split(key)
    k_raw = 9 * cin
    kp = _round_up(k_raw, LANE)
    c0p = _round_up(c0, LANE)
    w_stem = jax.random.normal(k1, (k_raw, c0), jnp.float32) * math.sqrt(2.0 / k_raw)
    w_head = jax.random.normal(k2, (c0, feat), jnp.float32) * math.sqrt(2.0 / c0)
    g0 = max(1, c0 // 16)
    g1 = max(1, feat // 16)
    return {
        "w_stem": _pad2d(w_stem, kp, c0p).astype(jnp.bfloat16),
        "b_stem": jnp.zeros((1, c0p), jnp.float32),
        "gn0_g": _pad2d(jnp.ones((1, c0), jnp.float32), 1, c0p),
        "gn0_b": jnp.zeros((1, c0p), jnp.float32),
        "gn0_avg": group_avg_matrix(c0, c0p, g0),
        "w_head": _pad2d(w_head, c0p, feat).astype(jnp.bfloat16),
        "b_head": jnp.zeros((1, feat), jnp.float32),
        "gn1_g": jnp.ones((1, feat), jnp.float32),
        "gn1_b": jnp.zeros((1, feat), jnp.float32),
        "gn1_avg": group_avg_matrix(feat, feat, g1),
    }


def _make_encoder_params(key, layers, d, heads, ff, dhp):
    dh = d // heads
    names = ("ln1_g", "ln1_b", "w_qkv", "b_qkv", "w_o", "b_o",
             "ln2_g", "ln2_b", "w_ff1", "b_ff1", "w_ff2", "b_ff2")
    stacks = {n: [] for n in names}
    keys = jax.random.split(key, layers)
    for l in range(layers):
        k1, k2, k3, k4 = jax.random.split(keys[l], 4)
        w_qkv = _xavier_uniform(k1, d, 3 * d)           # columns: [q | k | v]
        w_o = _xavier_uniform(k2, d, d)
        # Repack so each head's q/k/v occupies its own lane-aligned dhp tile.
        wqkv_p = jnp.zeros((d, heads * 3 * dhp), jnp.float32)
        wo_p = jnp.zeros((heads * dhp, d), jnp.float32)
        for h in range(heads):
            base = h * 3 * dhp
            wqkv_p = wqkv_p.at[:, base:base + dh].set(
                w_qkv[:, h * dh:(h + 1) * dh])
            wqkv_p = wqkv_p.at[:, base + dhp:base + dhp + dh].set(
                w_qkv[:, d + h * dh:d + (h + 1) * dh])
            wqkv_p = wqkv_p.at[:, base + 2 * dhp:base + 2 * dhp + dh].set(
                w_qkv[:, 2 * d + h * dh:2 * d + (h + 1) * dh])
            wo_p = wo_p.at[h * dhp:h * dhp + dh, :].set(w_o[h * dh:(h + 1) * dh, :])
        stacks["ln1_g"].append(jnp.ones((1, d), jnp.float32))
        stacks["ln1_b"].append(jnp.zeros((1, d), jnp.float32))
        stacks["w_qkv"].append(wqkv_p.astype(jnp.bfloat16))
        stacks["b_qkv"].append(jnp.zeros((1, heads * 3 * dhp), jnp.float32))
        stacks["w_o"].append(wo_p.astype(jnp.bfloat16))
        stacks["b_o"].append(jnp.zeros((1, d), jnp.float32))
        stacks["ln2_g"].append(jnp.ones((1, d), jnp.float32))
        stacks["ln2_b"].append(jnp.zeros((1, d), jnp.float32))
        stacks["w_ff1"].append(_xavier_uniform(k3, d, ff).astype(jnp.bfloat16))
        stacks["b_ff1"].append(jnp.zeros((1, ff), jnp.float32))
        stacks["w_ff2"].append(_xavier_uniform(k4, ff, d).astype(jnp.bfloat16))
        stacks["b_ff2"].append(jnp.zeros((1, d), jnp.float32))
    return {n: jnp.stack(v) for n, v in stacks.items()}


def init_params(key, *, context_size, D, feat, c0, heads, layers, ff_factor,
                num_classes):
    assert D % heads == 0 and D % LANE == 0 and feat % LANE == 0
    keys = jax.random.split(key, 8)
    ff = ff_factor * D
    fusion = 2 * D
    dhp = LANE                                   # per-head q/k/v lane-aligned tile
    return {
        "cfg": {"D": D, "heads": heads, "layers": layers, "dhp": dhp},
        "ctx_backbone": _make_backbone_params(keys[0], 3, c0, feat),
        "ref_backbone": _make_backbone_params(keys[1], 6, c0, feat),
        "compress_ctx_w": _xavier_uniform(keys[2], feat, D).astype(jnp.bfloat16),
        "compress_ctx_b": jnp.zeros((1, D), jnp.float32),
        "compress_ref_w": _xavier_uniform(keys[3], feat, D).astype(jnp.bfloat16),
        "compress_ref_b": jnp.zeros((1, D), jnp.float32),
        "pe": sinusoidal_positional_encoding(context_size + 1, D)[None],   # (1,S,D)
        "enc": _make_encoder_params(keys[7], layers, D, heads, ff, dhp),
        "cls_w1": _xavier_uniform(keys[4], fusion, fusion // 2),
        "cls_b1": jnp.zeros((1, fusion // 2), jnp.float32),
        "cls_w2": _xavier_uniform(keys[5], fusion // 2, fusion // 4),
        "cls_b2": jnp.zeros((1, fusion // 4), jnp.float32),
        "cls_w3": _xavier_uniform(keys[6], fusion // 4, num_classes),
        "cls_b3": jnp.zeros((1, num_classes), jnp.float32),
    }


# ----------------------------------------------------------------------------
# Main
# ----------------------------------------------------------------------------

if __name__ == "__main__":
    B, CONTEXT, REFERENCE, H, W = 2, 5, 3, 16, 16
    D, FEAT, C0 = 128, 256, 32
    HEADS, LAYERS, FF_FACTOR, NUM_CLASSES = 4, 2, 4, 2

    key = jax.random.PRNGKey(0)
    kp_, kc, kr = jax.random.split(key, 3)

    params = init_params(kp_, context_size=CONTEXT, D=D, feat=FEAT, c0=C0,
                         heads=HEADS, layers=LAYERS, ff_factor=FF_FACTOR,
                         num_classes=NUM_CLASSES)

    context_frames = jax.random.normal(kc, (B, CONTEXT, 3, H, W), jnp.float32)
    reference_frames = jax.random.normal(kr, (B, REFERENCE, 3, H, W), jnp.float32)

    logits = forward(params, context_frames, reference_frames)
    logits = jax.block_until_ready(logits)
    assert logits.shape == (B, NUM_CLASSES)
    assert bool(jnp.all(jnp.isfinite(logits)))
    print("KERNEL_OK")
</pallas_src>

<mosaic_0001>
module attributes {stable_mosaic.version = 11 : i64} {
  func.func @_backbone_kernel(%arg0: i32, %arg1: memref<1x64x128xbf16, #tpu.memory_space<vmem>>, %arg2: memref<128x128xbf16, #tpu.memory_space<vmem>>, %arg3: memref<1x128xf32, #tpu.memory_space<vmem>>, %arg4: memref<1x128xf32, #tpu.memory_space<vmem>>, %arg5: memref<1x128xf32, #tpu.memory_space<vmem>>, %arg6: memref<128x128xf32, #tpu.memory_space<vmem>>, %arg7: memref<128x256xbf16, #tpu.memory_space<vmem>>, %arg8: memref<1x256xf32, #tpu.memory_space<vmem>>, %arg9: memref<1x256xf32, #tpu.memory_space<vmem>>, %arg10: memref<1x256xf32, #tpu.memory_space<vmem>>, %arg11: memref<256x256xf32, #tpu.memory_space<vmem>>, %arg12: memref<256x128xbf16, #tpu.memory_space<vmem>>, %arg13: memref<1x128xf32, #tpu.memory_space<vmem>>, %arg14: memref<1x1x128xf32, #tpu.memory_space<vmem>>) attributes {dimension_semantics = [#tpu.dimension_semantics<parallel>], iteration_bounds = array<i64: 10>, scalar_prefetch = 0 : i64, scratch_operands = 0 : i64, tpu.core_type = #tpu.core_type<tc>, window_params = [{transform_indices = @transform_0, window_bounds = array<i64: 1, 64, 128>}, {pipeline_mode = #tpu.pipeline_mode<synchronous>, transform_indices = @transform_1, window_bounds = array<i64: 128, 128>}, {pipeline_mode = #tpu.pipeline_mode<synchronous>, transform_indices = @transform_2, window_bounds = array<i64: 1, 128>}, {pipeline_mode = #tpu.pipeline_mode<synchronous>, transform_indices = @transform_3, window_bounds = array<i64: 1, 128>}, {pipeline_mode = #tpu.pipeline_mode<synchronous>, transform_indices = @transform_4, window_bounds = array<i64: 1, 128>}, {pipeline_mode = #tpu.pipeline_mode<synchronous>, transform_indices = @transform_5, window_bounds = array<i64: 128, 128>}, {pipeline_mode = #tpu.pipeline_mode<synchronous>, transform_indices = @transform_6, window_bounds = array<i64: 128, 256>}, {pipeline_mode = #tpu.pipeline_mode<synchronous>, transform_indices = @transform_7, window_bounds = array<i64: 1, 256>}, {pipeline_mode = #tpu.pipeline_mode<synchronous>, transform_indices = @transform_8, window_bounds = array<i64: 1, 256>}, {pipeline_mode = #tpu.pipeline_mode<synchronous>, transform_indices = @transform_9, window_bounds = array<i64: 1, 256>}, {pipeline_mode = #tpu.pipeline_mode<synchronous>, transform_indices = @transform_10, window_bounds = array<i64: 256, 256>}, {pipeline_mode = #tpu.pipeline_mode<synchronous>, transform_indices = @transform_11, window_bounds = array<i64: 256, 128>}, {pipeline_mode = #tpu.pipeline_mode<synchronous>, transform_indices = @transform_12, window_bounds = array<i64: 1, 128>}, {transform_indices = @transform_13, window_bounds = array<i64: 1, 1, 128>}]} {
    %c0 = arith.constant 0 : index
    %c0_0 = arith.constant 0 : index
    %c0_1 = arith.constant 0 : index
    %0 = vector.load %arg1[%c0, %c0_0, %c0_1] : memref<1x64x128xbf16, #tpu.memory_space<vmem>>, vector<1x64x128xbf16>
    %1 = vector.shape_cast %0 : vector<1x64x128xbf16> to vector<64x128xbf16>
    %c0_2 = arith.constant 0 : index
    %c0_3 = arith.constant 0 : index
    %2 = vector.load %arg2[%c0_2, %c0_3] : memref<128x128xbf16, #tpu.memory_space<vmem>>, vector<128x128xbf16>
    %cst = arith.constant dense<0.000000e+00> : vector<64x128xf32>
    %3 = tpu.matmul %1, %2, %cst {dimension_numbers = #tpu.dot_dimension_numbers<[1], [0], [0], [1], [0, 0, 1, 1], [], []>} : vector<64x128xbf16>, vector<128x128xbf16>, vector<64x128xf32> -> vector<64x128xf32>
    %c0_4 = arith.constant 0 : index
    %c0_5 = arith.constant 0 : index
    %4 = vector.load %arg3[%c0_4, %c0_5] : memref<1x128xf32, #tpu.memory_space<vmem>>, vector<1x128xf32>
    %5 = vector.broadcast %4 : vector<1x128xf32> to vector<64x128xf32>
    %6 = arith.addf %3, %5 : vector<64x128xf32>
    %c0_6 = arith.constant 0 : index
    %c0_7 = arith.constant 0 : index
    %7 = vector.load %arg4[%c0_6, %c0_7] : memref<1x128xf32, #tpu.memory_space<vmem>>, vector<1x128xf32>
    %c0_8 = arith.constant 0 : index
    %c0_9 = arith.constant 0 : index
    %8 = vector.load %arg5[%c0_8, %c0_9] : memref<1x128xf32, #tpu.memory_space<vmem>>, vector<1x128xf32>
    %c0_10 = arith.constant 0 : index
    %c0_11 = arith.constant 0 : index
    %9 = vector.load %arg6[%c0_10, %c0_11] : memref<128x128xf32, #tpu.memory_space<vmem>>, vector<128x128xf32>
    %cst_12 = arith.constant dense<0.000000e+00> : vector<128xf32>
    %10 = vector.multi_reduction <add>, %6, %cst_12 [0] : vector<64x128xf32> to vector<128xf32>
    %11 = vector.shape_cast %10 : vector<128xf32> to vector<1x128xf32>
    %cst_13 = arith.constant dense<0.000000e+00> : vector<1x128xf32>
    %12 = tpu.matmul %11, %9, %cst_13 {dimension_numbers = #tpu.dot_dimension_numbers<[1], [0], [0], [1], [0, 0, 1, 1], [], []>} : vector<1x128xf32>, vector<128x128xf32>, vector<1x128xf32> -> vector<1x128xf32>
    %cst_14 = arith.constant 1.562500e-02 : f32
    %13 = vector.broadcast %cst_14 : f32 to vector<1x128xf32>
    %14 = arith.mulf %12, %13 : vector<1x128xf32>
    %15 = vector.broadcast %14 : vector<1x128xf32> to vector<64x128xf32>
    %16 = arith.subf %6, %15 : vector<64x128xf32>
    %17 = arith.mulf %16, %16 : vector<64x128xf32>
    %cst_15 = arith.constant dense<0.000000e+00> : vector<128xf32>
    %18 = vector.multi_reduction <add>, %17, %cst_15 [0] : vector<64x128xf32> to vector<128xf32>
    %19 = vector.shape_cast %18 : vector<128xf32> to vector<1x128xf32>
    %cst_16 = arith.constant dense<0.000000e+00> : vector<1x128xf32>
    %20 = tpu.matmul %19, %9, %cst_16 {dimension_numbers = #tpu.dot_dimension_numbers<[1], [0], [0], [1], [0, 0, 1, 1], [], []>} : vector<1x128xf32>, vector<128x128xf32>, vector<1x128xf32> -> vector<1x128xf32>
    %cst_17 = arith.constant 1.562500e-02 : f32
    %21 = vector.broadcast %cst_17 : f32 to vector<1x128xf32>
    %22 = arith.mulf %20, %21 : vector<1x128xf32>
    %cst_18 = arith.constant 9.99999974E-6 : f32
    %23 = vector.broadcast %cst_18 : f32 to vector<1x128xf32>
    %24 = arith.addf %22, %23 : vector<1x128xf32>
    %25 = math.rsqrt %24 : vector<1x128xf32>
    %26 = vector.broadcast %25 : vector<1x128xf32> to vector<64x128xf32>
    %27 = arith.mulf %16, %26 : vector<64x128xf32>
    %28 = vector.broadcast %7 : vector<1x128xf32> to vector<64x128xf32>
    %29 = arith.mulf %27, %28 : vector<64x128xf32>
    %30 = vector.broadcast %8 : vector<1x128xf32> to vector<64x128xf32>
    %31 = arith.addf %29, %30 : vector<64x128xf32>
    %32 = arith.negf %31 : vector<64x128xf32>
    %33 = math.exp %32 : vector<64x128xf32>
    %cst_19 = arith.constant 1.000000e+00 : f32
    %34 = vector.broadcast %cst_19 : f32 to vector<64x128xf32>
    %35 = arith.addf %34, %33 : vector<64x128xf32>
    %36 = arith.divf %34, %35 : vector<64x128xf32>
    %37 = arith.mulf %31, %36 : vector<64x128xf32>
    %38 = arith.truncf %37 : vector<64x128xf32> to vector<64x128xbf16>
    %c0_20 = arith.constant 0 : index
    %c0_21 = arith.constant 0 : index
    %39 = vector.load %arg7[%c0_20, %c0_21] : memref<128x256xbf16, #tpu.memory_space<vmem>>, vector<128x256xbf16>
    %cst_22 = arith.constant dense<0.000000e+00> : vector<64x256xf32>
    %40 = tpu.matmul %38, %39, %cst_22 {dimension_numbers = #tpu.dot_dimension_numbers<[1], [0], [0], [1], [0, 0, 1, 1], [], []>} : vector<64x128xbf16>, vector<128x256xbf16>, vector<64x256xf32> -> vector<64x256xf32>
    %c0_23 = arith.constant 0 : index
    %c0_24 = arith.constant 0 : index
    %41 = vector.load %arg8[%c0_23, %c0_24] : memref<1x256xf32, #tpu.memory_space<vmem>>, vector<1x256xf32>
    %42 = vector.broadcast %41 : vector<1x256xf32> to vector<64x256xf32>
    %43 = arith.addf %40, %42 : vector<64x256xf32>
    %c0_25 = arith.constant 0 : index
    %c0_26 = arith.constant 0 : index
    %44 = vector.load %arg9[%c0_25, %c0_26] : memref<1x256xf32, #tpu.memory_space<vmem>>, vector<1x256xf32>
    %c0_27 = arith.constant 0 : index
    %c0_28 = arith.constant 0 : index
    %45 = vector.load %arg10[%c0_27, %c0_28] : memref<1x256xf32, #tpu.memory_space<vmem>>, vector<1x256xf32>
    %c0_29 = arith.constant 0 : index
    %c0_30 = arith.constant 0 : index
    %46 = vector.load %arg11[%c0_29, %c0_30] : memref<256x256xf32, #tpu.memory_space<vmem>>, vector<256x256xf32>
    %cst_31 = arith.constant dense<0.000000e+00> : vector<256xf32>
    %47 = vector.multi_reduction <add>, %43, %cst_31 [0] : vector<64x256xf32> to vector<256xf32>
    %48 = vector.shape_cast %47 : vector<256xf32> to vector<1x256xf32>
    %cst_32 = arith.constant dense<0.000000e+00> : vector<1x256xf32>
    %49 = tpu.matmul %48, %46, %cst_32 {dimension_numbers = #tpu.dot_dimension_numbers<[1], [0], [0], [1], [0, 0, 1, 1], [], []>} : vector<1x256xf32>, vector<256x256xf32>, vector<1x256xf32> -> vector<1x256xf32>
    %cst_33 = arith.constant 1.562500e-02 : f32
    %50 = vector.broadcast %cst_33 : f32 to vector<1x256xf32>
    %51 = arith.mulf %49, %50 : vector<1x256xf32>
    %52 = vector.broadcast %51 : vector<1x256xf32> to vector<64x256xf32>
    %53 = arith.subf %43, %52 : vector<64x256xf32>
    %54 = arith.mulf %53, %53 : vector<64x256xf32>
    %cst_34 = arith.constant dense<0.000000e+00> : vector<256xf32>
    %55 = vector.multi_reduction <add>, %54, %cst_34 [0] : vector<64x256xf32> to vector<256xf32>
    %56 = vector.shape_cast %55 : vector<256xf32> to vector<1x256xf32>
    %cst_35 = arith.constant dense<0.000000e+00> : vector<1x256xf32>
    %57 = tpu.matmul %56, %46, %cst_35 {dimension_numbers = #tpu.dot_dimension_numbers<[1], [0], [0], [1], [0, 0, 1, 1], [], []>} : vector<1x256xf32>, vector<256x256xf32>, vector<1x256xf32> -> vector<1x256xf32>
    %cst_36 = arith.constant 1.562500e-02 : f32
    %58 = vector.broadcast %cst_36 : f32 to vector<1x256xf32>
    %59 = arith.mulf %57, %58 : vector<1x256xf32>
    %cst_37 = arith.constant 9.99999974E-6 : f32
    %60 = vector.broadcast %cst_37 : f32 to vector<1x256xf32>
    %61 = arith.addf %59, %60 : vector<1x256xf32>
    %62 = math.rsqrt %61 : vector<1x256xf32>
    %63 = vector.broadcast %62 : vector<1x256xf32> to vector<64x256xf32>
    %64 = arith.mulf %53, %63 : vector<64x256xf32>
    %65 = vector.broadcast %44 : vector<1x256xf32> to vector<64x256xf32>
    %66 = arith.mulf %64, %65 : vector<64x256xf32>
    %67 = vector.broadcast %45 : vector<1x256xf32> to vector<64x256xf32>
    %68 = arith.addf %66, %67 : vector<64x256xf32>
    %69 = arith.negf %68 : vector<64x256xf32>
    %70 = math.exp %69 : vector<64x256xf32>
    %cst_38 = arith.constant 1.000000e+00 : f32
    %71 = vector.broadcast %cst_38 : f32 to vector<64x256xf32>
    %72 = arith.addf %71, %70 : vector<64x256xf32>
    %73 = arith.divf %71, %72 : vector<64x256xf32>
    %74 = arith.mulf %68, %73 : vector<64x256xf32>
    %cst_39 = arith.constant dense<0.000000e+00> : vector<256xf32>
    %75 = vector.multi_reduction <add>, %74, %cst_39 [0] : vector<64x256xf32> to vector<256xf32>
    %76 = vector.shape_cast %75 : vector<256xf32> to vector<1x256xf32>
    %cst_40 = arith.constant 6.400000e+01 : f32
    %77 = vector.broadcast %cst_40 : f32 to vector<1x256xf32>
    %78 = arith.divf %76, %77 : vector<1x256xf32>
    %79 = arith.truncf %78 : vector<1x256xf32> to vector<1x256xbf16>
    %c0_41 = arith.constant 0 : index
    %c0_42 = arith.constant 0 : index
    %80 = vector.load %arg12[%c0_41, %c0_42] : memref<256x128xbf16, #tpu.memory_space<vmem>>, vector<256x128xbf16>
    %cst_43 = arith.constant dense<0.000000e+00> : vector<1x128xf32>
    %81 = tpu.matmul %79, %80, %cst_43 {dimension_numbers = #tpu.dot_dimension_numbers<[1], [0], [0], [1], [0, 0, 1, 1], [], []>} : vector<1x256xbf16>, vector<256x128xbf16>, vector<1x128xf32> -> vector<1x128xf32>
    %c0_44 = arith.constant 0 : index
    %c0_45 = arith.constant 0 : index
    %82 = vector.load %arg13[%c0_44, %c0_45] : memref<1x128xf32, #tpu.memory_space<vmem>>, vector<1x128xf32>
    %83 = arith.addf %81, %82 : vector<1x128xf32>
    %c0_46 = arith.constant 0 : index
    %c0_47 = arith.constant 0 : index
    %c0_48 = arith.constant 0 : index
    %84 = vector.load %arg14[%c0_46, %c0_47, %c0_48] : memref<1x1x128xf32, #tpu.memory_space<vmem>>, vector<1x1x128xf32>
    %85 = vector.shape_cast %84 : vector<1x1x128xf32> to vector<1x128xf32>
    %86 = vector.shape_cast %83 : vector<1x128xf32> to vector<1x1x128xf32>
    tpu.vector_store %arg14[%c0_46, %c0_47, %c0_48], %86 {strides = array<i32>} : memref<1x1x128xf32, #tpu.memory_space<vmem>>, vector<1x1x128xf32>,
    return
  }
  func.func @transform_0(%arg0: i32) -> (i32, i32, i32) {
    %c0_i32 = arith.constant 0 : i32
    %c0_i32_0 = arith.constant 0 : i32
    %c0_i32_1 = arith.constant 0 : i32
    return %arg0, %c0_i32, %c0_i32_0 : i32, i32, i32
  }
  func.func @transform_1(%arg0: i32) -> (i32, i32) {
    %c0_i32 = arith.constant 0 : i32
    %c0_i32_0 = arith.constant 0 : i32
    %c0_i32_1 = arith.constant 0 : i32
    return %c0_i32, %c0_i32_0 : i32, i32
  }
  func.func @transform_2(%arg0: i32) -> (i32, i32) {
    %c0_i32 = arith.constant 0 : i32
    %c0_i32_0 = arith.constant 0 : i32
    %c0_i32_1 = arith.constant 0 : i32
    return %c0_i32, %c0_i32_0 : i32, i32
  }
  func.func @transform_3(%arg0: i32) -> (i32, i32) {
    %c0_i32 = arith.constant 0 : i32
    %c0_i32_0 = arith.constant 0 : i32
    %c0_i32_1 = arith.constant 0 : i32
    return %c0_i32, %c0_i32_0 : i32, i32
  }
  func.func @transform_4(%arg0: i32) -> (i32, i32) {
    %c0_i32 = arith.constant 0 : i32
    %c0_i32_0 = arith.constant 0 : i32
    %c0_i32_1 = arith.constant 0 : i32
    return %c0_i32, %c0_i32_0 : i32, i32
  }
  func.func @transform_5(%arg0: i32) -> (i32, i32) {
    %c0_i32 = arith.constant 0 : i32
    %c0_i32_0 = arith.constant 0 : i32
    %c0_i32_1 = arith.constant 0 : i32
    return %c0_i32, %c0_i32_0 : i32, i32
  }
  func.func @transform_6(%arg0: i32) -> (i32, i32) {
    %c0_i32 = arith.constant 0 : i32
    %c0_i32_0 = arith.constant 0 : i32
    %c0_i32_1 = arith.constant 0 : i32
    return %c0_i32, %c0_i32_0 : i32, i32
  }
  func.func @transform_7(%arg0: i32) -> (i32, i32) {
    %c0_i32 = arith.constant 0 : i32
    %c0_i32_0 = arith.constant 0 : i32
    %c0_i32_1 = arith.constant 0 : i32
    return %c0_i32, %c0_i32_0 : i32, i32
  }
  func.func @transform_8(%arg0: i32) -> (i32, i32) {
    %c0_i32 = arith.constant 0 : i32
    %c0_i32_0 = arith.constant 0 : i32
    %c0_i32_1 = arith.constant 0 : i32
    return %c0_i32, %c0_i32_0 : i32, i32
  }
  func.func @transform_9(%arg0: i32) -> (i32, i32) {
    %c0_i32 = arith.constant 0 : i32
    %c0_i32_0 = arith.constant 0 : i32
    %c0_i32_1 = arith.constant 0 : i32
    return %c0_i32, %c0_i32_0 : i32, i32
  }
  func.func @transform_10(%arg0: i32) -> (i32, i32) {
    %c0_i32 = arith.constant 0 : i32
    %c0_i32_0 = arith.constant 0 : i32
    %c0_i32_1 = arith.constant 0 : i32
    return %c0_i32, %c0_i32_0 : i32, i32
  }
  func.func @transform_11(%arg0: i32) -> (i32, i32) {
    %c0_i32 = arith.constant 0 : i32
    %c0_i32_0 = arith.constant 0 : i32
    %c0_i32_1 = arith.constant 0 : i32
    return %c0_i32, %c0_i32_0 : i32, i32
  }
  func.func @transform_12(%arg0: i32) -> (i32, i32) {
    %c0_i32 = arith.constant 0 : i32
    %c0_i32_0 = arith.constant 0 : i32
    %c0_i32_1 = arith.constant 0 : i32
    return %c0_i32, %c0_i32_0 : i32, i32
  }
  func.func @transform_13(%arg0: i32) -> (i32, i32, i32) {
    %c0_i32 = arith.constant 0 : i32
    %c0_i32_0 = arith.constant 0 : i32
    %c0_i32_1 = arith.constant 0 : i32
    return %arg0, %c0_i32, %c0_i32_0 : i32, i32, i32
  }
}

</mosaic_0001>

<llo_original>
// kernel: tpu_custom_call.1
$region0: #{tpu_custom_call.1}
  #allocation0 [shape = 'u32[]', space=smem, size = 0x4, offset = 0x4, fixed_abs, tag = 'smem constant byte address 0x4 - core index']
  #allocation1 [shape = 'u32[144,128]{1,0:T(1,128)}', space=vmem, size = 0x12000, scoped, tag = 'internal scratch']
  %s0 = inlined_call_operand.hbm [shape: bf16[10,64,128], index: 0, kind: input, shape index: {}]
  %s1 = inlined_call_operand.hbm [shape: bf16[128,128], index: 1, kind: input, shape index: {}]
  %s2 = inlined_call_operand.vmem [shape: f32[1,128], index: 2, kind: input, shape index: {}]
  %s3 = inlined_call_operand.hbm [shape: f32[1,128], index: 3, kind: input, shape index: {}]
  %s4 = inlined_call_operand.hbm [shape: f32[1,128], index: 4, kind: input, shape index: {}]
  %s5 = inlined_call_operand.hbm [shape: f32[128,128], index: 5, kind: input, shape index: {}]
  %s6 = inlined_call_operand.hbm [shape: bf16[128,256], index: 6, kind: input, shape index: {}]
  %s7 = inlined_call_operand.vmem [shape: f32[1,256], index: 7, kind: input, shape index: {}]
  %s8 = inlined_call_operand.vmem [shape: f32[1,256], index: 8, kind: input, shape index: {}]
  %s9 = inlined_call_operand.vmem [shape: f32[1,256], index: 9, kind: input, shape index: {}]
  %s10 = inlined_call_operand.hbm [shape: f32[256,256], index: 10, kind: input, shape index: {}]
  %s11 = inlined_call_operand.hbm [shape: bf16[256,128], index: 11, kind: input, shape index: {}]
  %s12 = inlined_call_operand.vmem [shape: f32[1,128], index: 12, kind: input, shape index: {}]
  %s13 = inlined_call_operand.hbm [shape: f32[10,1,128], index: 13, kind: output, shape index: {}]
  %s14 = sld [smem:[#allocation0]]
  $region117: #{tpu_custom_call.1} parent=0
    _
  %s16 = ssub.s32 1, %s14
  %s17 = scalar_select 0, %s16, %s14
  $region1: #{tpu_custom_call.1} parent=0
    #allocation2 [shape = 'u8[32768]{0}', space=vmem, size = 0x8000, scoped, tag = 'input window, operand 0']
    #allocation3 [shape = 's32[2]{0}', space=sflag, size = 0x8, scoped, tag = 'scoped memory for tpu_custom_call.1']
    #allocation4 [shape = 's32[2]{0}', space=sflag, size = 0x8, scoped, tag = 'scoped memory for tpu_custom_call.1']
    #allocation5 [shape = 'u8[32768]{0}', space=vmem, size = 0x8000, scoped, tag = 'input window, operand 1, single buffered']
    #allocation6 [shape = 's32[1]{0}', space=sflag, size = 0x4, scoped, tag = 'scoped memory for tpu_custom_call.1']
    #allocation7 [shape = 'u8[512]{0}', space=vmem, size = 0x400, scoped, tag = 'input window, operand 3, single buffered']
    #allocation8 [shape = 'u8[512]{0}', space=vmem, size = 0x400, scoped, tag = 'input window, operand 4, single buffered']
    #allocation9 [shape = 's32[1]{0}', space=sflag, size = 0x4, scoped, tag = 'scoped memory for tpu_custom_call.1']
    #allocation10 [shape = 'u8[65536]{0}', space=vmem, size = 0x10000, scoped, tag = 'input window, operand 5, single buffered']
    #allocation11 [shape = 'u8[65536]{0}', space=vmem, size = 0x10000, scoped, tag = 'input window, operand 6, single buffered']
    #allocation12 [shape = 's32[1]{0}', space=sflag, size = 0x4, scoped, tag = 'scoped memory for tpu_custom_call.1']
    #allocation13 [shape = 'u8[262144]{0}', space=vmem, size = 0x40000, scoped, tag = 'input window, operand 10, single buffered']
    #allocation14 [shape = 'u8[65536]{0}', space=vmem, size = 0x10000, scoped, tag = 'input window, operand 11, single buffered']
    #allocation15 [shape = 's32[1]{0}', space=sflag, size = 0x4, scoped, tag = 'scoped memory for tpu_custom_call.1']
    #allocation16 [shape = 'u8[1024]{0}', space=vmem, size = 0x400, scoped, tag = 'output window, operand 0']
    %18 = vsyncpa [#allocation3], 0
    %s19 = scalar_lea.sflag [#allocation3], 1
    %20 = vsyncpa %s19, 0
    %21 = vsyncpa [#allocation6], 0
    %22 = vsyncpa [#allocation9], 0
    %23 = vsyncpa [#allocation12], 0
    %24 = vsyncpa [#allocation15], 0
    %25 = vsyncpa [#allocation4], 0
    %s26 = scalar_lea.sflag [#allocation4], 1
    %27 = vsyncpa %s26, 0
    loop: start=0, step=1, limit=12
    $region2: #{tpu_custom_call.1} parent=1 // loop_pre_header
      _
    $region3: #{tpu_custom_call.1} parent=1 // loop_header
      %s29 = sphi 0, %s33
      %p30 = scmp.ge.s32.totalorder %s29, 12
      %s39 = sphi 0, %s41
      %s42 = sphi 0, %s39
      %s43 = sphi 0, %s42
      %s59 = sphi 0, %s43
      %s63 = sphi 0, %s63
      %s65 = sphi 0, %s63
      %s66 = sphi 0, %s65
      %s80 = sphi 0, %s66
      %s84 = sphi 0, %s84
      %s86 = sphi 0, %s84
      %s87 = sphi 0, %s86
      %s101 = sphi 0, %s87
      %s105 = sphi 0, %s105
      %s107 = sphi 0, %s105
      %s108 = sphi 0, %s107
      %s122 = sphi 0, %s108
      %s126 = sphi 0, %s126
      %s128 = sphi 0, %s126
      %s129 = sphi 0, %s128
      %s143 = sphi 0, %s129
      %s147 = sphi 0, %s147
      %s149 = sphi 0, %s147
      %s150 = sphi 0, %s149
      %s164 = sphi 0, %s150
      %s168 = sphi 0, %s168
      %s170 = sphi 0, %s168
      %s171 = sphi 0, %s170
      %s185 = sphi 0, %s171
      %s189 = sphi 0, %s189
      %s191 = sphi 0, %s189
      %s192 = sphi 0, %s191
      %s206 = sphi 0, %s192
      %s210 = sphi 0, %s210
      %s212 = sphi 0, %s210
      %s213 = sphi 0, %s212
      %s227 = sphi 0, %s213
      %s231 = sphi 0, %s231
      %s233 = sphi 0, %s231
      %s234 = sphi 0, %s233
      %s248 = sphi 0, %s234
      %s252 = sphi 0, %s252
      %s254 = sphi 0, %s252
      %s255 = sphi 0, %s254
      %s269 = sphi 0, %s255
      %s273 = sphi 0, %s273
      %s275 = sphi 0, %s273
      %s276 = sphi 0, %s275
      %s290 = sphi 0, %s276
      %s294 = sphi 0, %s294
      %s296 = sphi 0, %s294
      %s297 = sphi 0, %s296
      %s311 = sphi 0, %s297
      %s317 = sphi 0, %s319
      %s320 = sphi 0, %s317
      %s321 = sphi 0, %s320
      %s337 = sphi 0, %s321
    $region4: #{tpu_custom_call.1} parent=1 // loop_header_branch
      %32 = sbr.rel (%p30) target = $region8
    $region5: #{tpu_custom_call.1} parent=1 // loop_body
      %s34 = ssub.s32 %s29, 1
      %s35 = ssub.s32 %s29, 2
      %s36 = sadd.s32 %s29, 1
      %s37 = ssub.s32 %s29, %s36
      %p38 = scmp.eq.s32.totalorder %s37, 0
      %s40 = sadd.s32 %s39, 1
      %s41 = scalar_select %p38, %s39, %s40
      %p44 = pneg %p38
      %p45 = scmp.eq.s32.totalorder %s29, 9
      %p46 = por %p44, %p45
      %p47 = scmp.ne.s32.totalorder %s39, %s42
      %p48 = scmp.eq.s32.totalorder %s29, 0
      %p49 = por %p47, %p48
      %p50 = scmp.ne.s32.totalorder %s39, %s42
      %p51 = scmp.eq.s32.totalorder %s34, 9
      %p52 = por %p50, %p51
      %p53 = scmp.ne.s32.totalorder %s42, %s43
      %p54 = scmp.eq.s32.totalorder %s34, 0
      %p55 = por %p53, %p54
      %p56 = scmp.ne.s32.totalorder %s42, %s43
      %p57 = scmp.eq.s32.totalorder %s35, 9
      %p58 = por %p56, %p57
      %p60 = scmp.ne.s32.totalorder %s43, %s59
      %p61 = scmp.eq.s32.totalorder %s35, 0
      %p62 = por %p60, %p61
      %s64 = sadd.s32 %s63, 1
      %p67 = scmp.eq.s32.totalorder %s29, 9
      %p68 = scmp.ne.s32.totalorder %s63, %s65
      %p69 = scmp.eq.s32.totalorder %s29, 0
      %p70 = por %p68, %p69
      %p71 = scmp.ne.s32.totalorder %s63, %s65
      %p72 = scmp.eq.s32.totalorder %s34, 9
      %p73 = por %p71, %p72
      %p74 = scmp.ne.s32.totalorder %s65, %s66
      %p75 = scmp.eq.s32.totalorder %s34, 0
      %p76 = por %p74, %p75
      %p77 = scmp.ne.s32.totalorder %s65, %s66
      %p78 = scmp.eq.s32.totalorder %s35, 9
      %p79 = por %p77, %p78
      %p81 = scmp.ne.s32.totalorder %s66, %s80
      %p82 = scmp.eq.s32.totalorder %s35, 0
      %p83 = por %p81, %p82
      %s85 = sadd.s32 %s84, 1
      %p88 = scmp.eq.s32.totalorder %s29, 9
      %p89 = scmp.ne.s32.totalorder %s84, %s86
      %p90 = scmp.eq.s32.totalorder %s29, 0
      %p91 = por %p89, %p90
      %p92 = scmp.ne.s32.totalorder %s84, %s86
      %p93 = scmp.eq.s32.totalorder %s34, 9
      %p94 = por %p92, %p93
      %p95 = scmp.ne.s32.totalorder %s86, %s87
      %p96 = scmp.eq.s32.totalorder %s34, 0
      %p97 = por %p95, %p96
      %p98 = scmp.ne.s32.totalorder %s86, %s87
      %p99 = scmp.eq.s32.totalorder %s35, 9
      %p100 = por %p98, %p99
      %p102 = scmp.ne.s32.totalorder %s87, %s101
      %p103 = scmp.eq.s32.totalorder %s35, 0
      %p104 = por %p102, %p103
      %s106 = sadd.s32 %s105, 1
      %p109 = scmp.eq.s32.totalorder %s29, 9
      %p110 = scmp.ne.s32.totalorder %s105, %s107
      %p111 = scmp.eq.s32.totalorder %s29, 0
      %p112 = por %p110, %p111
      %p113 = scmp.ne.s32.totalorder %s105, %s107
      %p114 = scmp.eq.s32.totalorder %s34, 9
      %p115 = por %p113, %p114
      %p116 = scmp.ne.s32.totalorder %s107, %s108
      %p117 = scmp.eq.s32.totalorder %s34, 0
      %p118 = por %p116, %p117
      %p119 = scmp.ne.s32.totalorder %s107, %s108
      %p120 = scmp.eq.s32.totalorder %s35, 9
      %p121 = por %p119, %p120
      %p123 = scmp.ne.s32.totalorder %s108, %s122
      %p124 = scmp.eq.s32.totalorder %s35, 0
      %p125 = por %p123, %p124
      %s127 = sadd.s32 %s126, 1
      %p130 = scmp.eq.s32.totalorder %s29, 9
      %p131 = scmp.ne.s32.totalorder %s126, %s128
      %p132 = scmp.eq.s32.totalorder %s29, 0
      %p133 = por %p131, %p132
      %p134 = scmp.ne.s32.totalorder %s126, %s128
      %p135 = scmp.eq.s32.totalorder %s34, 9
      %p136 = por %p134, %p135
      %p137 = scmp.ne.s32.totalorder %s128, %s129
      %p138 = scmp.eq.s32.totalorder %s34, 0
      %p139 = por %p137, %p138
      %p140 = scmp.ne.s32.totalorder %s128, %s129
      %p141 = scmp.eq.s32.totalorder %s35, 9
      %p142 = por %p140, %p141
      %p144 = scmp.ne.s32.totalorder %s129, %s143
      %p145 = scmp.eq.s32.totalorder %s35, 0
      %p146 = por %p144, %p145
      %s148 = sadd.s32 %s147, 1
      %p151 = scmp.eq.s32.totalorder %s29, 9
      %p152 = scmp.ne.s32.totalorder %s147, %s149
      %p153 = scmp.eq.s32.totalorder %s29, 0
      %p154 = por %p152, %p153
      %p155 = scmp.ne.s32.totalorder %s147, %s149
      %p156 = scmp.eq.s32.totalorder %s34, 9
      %p157 = por %p155, %p156
      %p158 = scmp.ne.s32.totalorder %s149, %s150
      %p159 = scmp.eq.s32.totalorder %s34, 0
      %p160 = por %p158, %p159
      %p161 = scmp.ne.s32.totalorder %s149, %s150
      %p162 = scmp.eq.s32.totalorder %s35, 9
      %p163 = por %p161, %p162
      %p165 = scmp.ne.s32.totalorder %s150, %s164
      %p166 = scmp.eq.s32.totalorder %s35, 0
      %p167 = por %p165, %p166
      %s169 = sadd.s32 %s168, 1
      %p172 = scmp.eq.s32.totalorder %s29, 9
      %p173 = scmp.ne.s32.totalorder %s168, %s170
      %p174 = scmp.eq.s32.totalorder %s29, 0
      %p175 = por %p173, %p174
      %p176 = scmp.ne.s32.totalorder %s168, %s170
      %p177 = scmp.eq.s32.totalorder %s34, 9
      %p178 = por %p176, %p177
      %p179 = scmp.ne.s32.totalorder %s170, %s171
      %p180 = scmp.eq.s32.totalorder %s34, 0
      %p181 = por %p179, %p180
      %p182 = scmp.ne.s32.totalorder %s170, %s171
      %p183 = scmp.eq.s32.totalorder %s35, 9
      %p184 = por %p182, %p183
      %p186 = scmp.ne.s32.totalorder %s171, %s185
      %p187 = scmp.eq.s32.totalorder %s35, 0
      %p188 = por %p186, %p187
      %s190 = sadd.s32 %s189, 1
      %p193 = scmp.eq.s32.totalorder %s29, 9
      %p194 = scmp.ne.s32.totalorder %s189, %s191
      %p195 = scmp.eq.s32.totalorder %s29, 0
      %p196 = por %p194, %p195
      %p197 = scmp.ne.s32.totalorder %s189, %s191
      %p198 = scmp.eq.s32.totalorder %s34, 9
      %p199 = por %p197, %p198
      %p200 = scmp.ne.s32.totalorder %s191, %s192
      %p201 = scmp.eq.s32.totalorder %s34, 0
      %p202 = por %p200, %p201
      %p203 = scmp.ne.s32.totalorder %s191, %s192
      %p204 = scmp.eq.s32.totalorder %s35, 9
      %p205 = por %p203, %p204
      %p207 = scmp.ne.s32.totalorder %s192, %s206
      %p208 = scmp.eq.s32.totalorder %s35, 0
      %p209 = por %p207, %p208
      %s211 = sadd.s32 %s210, 1
      %p214 = scmp.eq.s32.totalorder %s29, 9
      %p215 = scmp.ne.s32.totalorder %s210, %s212
      %p216 = scmp.eq.s32.totalorder %s29, 0
      %p217 = por %p215, %p216
      %p218 = scmp.ne.s32.totalorder %s210, %s212
      %p219 = scmp.eq.s32.totalorder %s34, 9
      %p220 = por %p218, %p219
      %p221 = scmp.ne.s32.totalorder %s212, %s213
      %p222 = scmp.eq.s32.totalorder %s34, 0
      %p223 = por %p221, %p222
      %p224 = scmp.ne.s32.totalorder %s212, %s213
      %p225 = scmp.eq.s32.totalorder %s35, 9
      %p226 = por %p224, %p225
      %p228 = scmp.ne.s32.totalorder %s213, %s227
      %p229 = scmp.eq.s32.totalorder %s35, 0
      %p230 = por %p228, %p229
      %s232 = sadd.s32 %s231, 1
      %p235 = scmp.eq.s32.totalorder %s29, 9
      %p236 = scmp.ne.s32.totalorder %s231, %s233
      %p237 = scmp.eq.s32.totalorder %s29, 0
      %p238 = por %p236, %p237
      %p239 = scmp.ne.s32.totalorder %s231, %s233
      %p240 = scmp.eq.s32.totalorder %s34, 9
      %p241 = por %p239, %p240
      %p242 = scmp.ne.s32.totalorder %s233, %s234
      %p243 = scmp.eq.s32.totalorder %s34, 0
      %p244 = por %p242, %p243
      %p245 = scmp.ne.s32.totalorder %s233, %s234
      %p246 = scmp.eq.s32.totalorder %s35, 9
      %p247 = por %p245, %p246
      %p249 = scmp.ne.s32.totalorder %s234, %s248
      %p250 = scmp.eq.s32.totalorder %s35, 0
      %p251 = por %p249, %p250
      %s253 = sadd.s32 %s252, 1
      %p256 = scmp.eq.s32.totalorder %s29, 9
      %p257 = scmp.ne.s32.totalorder %s252, %s254
      %p258 = scmp.eq.s32.totalorder %s29, 0
      %p259 = por %p257, %p258
      %p260 = scmp.ne.s32.totalorder %s252, %s254
      %p261 = scmp.eq.s32.totalorder %s34, 9
      %p262 = por %p260, %p261
      %p263 = scmp.ne.s32.totalorder %s254, %s255
      %p264 = scmp.eq.s32.totalorder %s34, 0
      %p265 = por %p263, %p264
      %p266 = scmp.ne.s32.totalorder %s254, %s255
      %p267 = scmp.eq.s32.totalorder %s35, 9
      %p268 = por %p266, %p267
      %p270 = scmp.ne.s32.totalorder %s255, %s269
      %p271 = scmp.eq.s32.totalorder %s35, 0
      %p272 = por %p270, %p271
      %s274 = sadd.s32 %s273, 1
      %p277 = scmp.eq.s32.totalorder %s29, 9
      %p278 = scmp.ne.s32.totalorder %s273, %s275
      %p279 = scmp.eq.s32.totalorder %s29, 0
      %p280 = por %p278, %p279
      %p281 = scmp.ne.s32.totalorder %s273, %s275
      %p282 = scmp.eq.s32.totalorder %s34, 9
      %p283 = por %p281, %p282
      %p284 = scmp.ne.s32.totalorder %s275, %s276
      %p285 = scmp.eq.s32.totalorder %s34, 0
      %p286 = por %p284, %p285
      %p287 = scmp.ne.s32.totalorder %s275, %s276
      %p288 = scmp.eq.s32.totalorder %s35, 9
      %p289 = por %p287, %p288
      %p291 = scmp.ne.s32.totalorder %s276, %s290
      %p292 = scmp.eq.s32.totalorder %s35, 0
      %p293 = por %p291, %p292
      %s295 = sadd.s32 %s294, 1
      %p298 = scmp.eq.s32.totalorder %s29, 9
      %p299 = scmp.ne.s32.totalorder %s294, %s296
      %p300 = scmp.eq.s32.totalorder %s29, 0
      %p301 = por %p299, %p300
      %p302 = scmp.ne.s32.totalorder %s294, %s296
      %p303 = scmp.eq.s32.totalorder %s34, 9
      %p304 = por %p302, %p303
      %p305 = scmp.ne.s32.totalorder %s296, %s297
      %p306 = scmp.eq.s32.totalorder %s34, 0
      %p307 = por %p305, %p306
      %p308 = scmp.ne.s32.totalorder %s296, %s297
      %p309 = scmp.eq.s32.totalorder %s35, 9
      %p310 = por %p308, %p309
      %p312 = scmp.ne.s32.totalorder %s297, %s311
      %p313 = scmp.eq.s32.totalorder %s35, 0
      %p314 = por %p312, %p313
      %s315 = ssub.s32 %s29, %s36
      %p316 = scmp.eq.s32.totalorder %s315, 0
      %s318 = sadd.s32 %s317, 1
      %s319 = scalar_select %p316, %s317, %s318
      %p322 = pneg %p316
      %p323 = scmp.eq.s32.totalorder %s29, 9
      %p324 = por %p322, %p323
      %p325 = scmp.ne.s32.totalorder %s317, %s320
      %p326 = scmp.eq.s32.totalorder %s29, 0
      %p327 = por %p325, %p326
      %p328 = scmp.ne.s32.totalorder %s317, %s320
      %p329 = scmp.eq.s32.totalorder %s34, 9
      %p330 = por %p328, %p329
      %p331 = scmp.ne.s32.totalorder %s320, %s321
      %p332 = scmp.eq.s32.totalorder %s34, 0
      %p333 = por %p331, %p332
      %p334 = scmp.ne.s32.totalorder %s320, %s321
      %p335 = scmp.eq.s32.totalorder %s35, 9
      %p336 = por %p334, %p335
      %p338 = scmp.ne.s32.totalorder %s321, %s337
      %p339 = scmp.eq.s32.totalorder %s35, 0
      %p340 = por %p338, %p339
      %p341 = scmp.le.s32.totalorder 1, %s29
      %p342 = scmp.lt.s32.totalorder %s29, 11
      %p343 = pnand %p341, %p342
      %p344 = pneg %p343
      // Predicated region
      $region9: #{tpu_custom_call.1} parent=5 // pred_check
        _
      $region10: #{tpu_custom_call.1} parent=5 // pred_check_branch
        %346 = sbr.rel (%p343) target = $region12
      $region11: #{tpu_custom_call.1} parent=5 // pred_region
        %s347 = ssub.s32 %s29, 1
        // Predicated region
        $region13: #{tpu_custom_call.1} parent=11 // pred_check
          %p348 = pneg %p76
        $region14: #{tpu_custom_call.1} parent=11 // pred_check_branch
          %350 = sbr.rel (%p348) target = $region16
        $region15: #{tpu_custom_call.1} parent=11 // pred_region
          %s352 = ssub.s32 1024, 1024
          %353 = vsyncadd [#allocation6], %s352
          %s354 = sshll.u32 [#allocation5], 4
          %s355 = int_to_ptr.vmem [resolvable:$true] %s354
          %360 = dma.hbm_to_vmem [thread:$0]  %s1, 1024, %s355, [#allocation6], 64, 64, 4
        $region16: #{tpu_custom_call.1} parent=11 // pred_fallthru
          _
        // Predicated region
        $region17: #{tpu_custom_call.1} parent=11 // pred_check
          %p361 = pneg %p97
        $region18: #{tpu_custom_call.1} parent=11 // pred_check_branch
          %363 = sbr.rel (%p361) target = $region20
        $region19: #{tpu_custom_call.1} parent=11 // pred_region
          _
        $region20: #{tpu_custom_call.1} parent=11 // pred_fallthru
          _
        // Predicated region
        $region21: #{tpu_custom_call.1} parent=11 // pred_check
          %p364 = pneg %p118
        $region22: #{tpu_custom_call.1} parent=11 // pred_check_branch
          %366 = sbr.rel (%p364) target = $region24
        $region23: #{tpu_custom_call.1} parent=11 // pred_region
          %s368 = ssub.s32 16, 16
          %369 = vsyncadd [#allocation6], %s368
          %s371 = sshll.u32 [#allocation7], 4
          %s372 = int_to_ptr.vmem [resolvable:$true] %s371
          %374 = dma.hbm_to_vmem [thread:$0]  %s3, 16, %s372, [#allocation6]
        $region24: #{tpu_custom_call.1} parent=11 // pred_fallthru
          _
        // Predicated region
        $region25: #{tpu_custom_call.1} parent=11 // pred_check
          %p375 = pneg %p139
        $region26: #{tpu_custom_call.1} parent=11 // pred_check_branch
          %377 = sbr.rel (%p375) target = $region28
        $region27: #{tpu_custom_call.1} parent=11 // pred_region
          %s379 = ssub.s32 16, 16
          %380 = vsyncadd [#allocation9], %s379
          %s382 = sshll.u32 [#allocation8], 4
          %s383 = int_to_ptr.vmem [resolvable:$true] %s382
          %385 = dma.hbm_to_vmem [thread:$0]  %s4, 16, %s383, [#allocation9]
        $region28: #{tpu_custom_call.1} parent=11 // pred_fallthru
          _
        // Predicated region
        $region29: #{tpu_custom_call.1} parent=11 // pred_check
          %p386 = pneg %p160
        $region30: #{tpu_custom_call.1} parent=11 // pred_check_branch
          %388 = sbr.rel (%p386) target = $region32
        $region31: #{tpu_custom_call.1} parent=11 // pred_region
          %s390 = ssub.s32 2048, 2048
          %391 = vsyncadd [#allocation9], %s390
          %s392 = sshll.u32 [#allocation10], 4
          %s393 = int_to_ptr.vmem [resolvable:$true] %s392
          %398 = dma.hbm_to_vmem [thread:$0]  %s5, 2048, %s393, [#allocation9], 128, 128, 8
        $region32: #{tpu_custom_call.1} parent=11 // pred_fallthru
          _
        // Predicated region
        $region33: #{tpu_custom_call.1} parent=11 // pred_check
          %p399 = pneg %p181
        $region34: #{tpu_custom_call.1} parent=11 // pred_check_branch
          %401 = sbr.rel (%p399) target = $region36
        $region35: #{tpu_custom_call.1} parent=11 // pred_region
          %s403 = ssub.s32 2048, 2048
          %404 = vsyncadd [#allocation12], %s403
          %s405 = sshll.u32 [#allocation11], 4
          %s406 = int_to_ptr.vmem [resolvable:$true] %s405
          %411 = dma.hbm_to_vmem [thread:$0]  %s6, 2048, %s406, [#allocation12], 128, 128, 8
        $region36: #{tpu_custom_call.1} parent=11 // pred_fallthru
          _
        // Predicated region
        $region37: #{tpu_custom_call.1} parent=11 // pred_check
          %p412 = pneg %p202
        $region38: #{tpu_custom_call.1} parent=11 // pred_check_branch
          %414 = sbr.rel (%p412) target = $region40
        $region39: #{tpu_custom_call.1} parent=11 // pred_region
          _
        $region40: #{tpu_custom_call.1} parent=11 // pred_fallthru
          _
        // Predicated region
        $region41: #{tpu_custom_call.1} parent=11 // pred_check
          %p415 = pneg %p223
        $region42: #{tpu_custom_call.1} parent=11 // pred_check_branch
          %417 = sbr.rel (%p415) target = $region44
        $region43: #{tpu_custom_call.1} parent=11 // pred_region
          _
        $region44: #{tpu_custom_call.1} parent=11 // pred_fallthru
          _
        // Predicated region
        $region45: #{tpu_custom_call.1} parent=11 // pred_check
          %p418 = pneg %p244
        $region46: #{tpu_custom_call.1} parent=11 // pred_check_branch
          %420 = sbr.rel (%p418) target = $region48
        $region47: #{tpu_custom_call.1} parent=11 // pred_region
          _
        $region48: #{tpu_custom_call.1} parent=11 // pred_fallthru
          _
        // Predicated region
        $region49: #{tpu_custom_call.1} parent=11 // pred_check
          %p421 = pneg %p265
        $region50: #{tpu_custom_call.1} parent=11 // pred_check_branch
          %423 = sbr.rel (%p421) target = $region52
        $region51: #{tpu_custom_call.1} parent=11 // pred_region
          %s425 = ssub.s32 8192, 8192
          %426 = vsyncadd [#allocation12], %s425
          %s427 = sshll.u32 [#allocation13], 4
          %s428 = int_to_ptr.vmem [resolvable:$true] %s427
          %433 = dma.hbm_to_vmem [thread:$0]  %s10, 8192, %s428, [#allocation12], 256, 256, 16
        $region52: #{tpu_custom_call.1} parent=11 // pred_fallthru
          _
        // Predicated region
        $region53: #{tpu_custom_call.1} parent=11 // pred_check
          %p434 = pneg %p286
        $region54: #{tpu_custom_call.1} parent=11 // pred_check_branch
          %436 = sbr.rel (%p434) target = $region56
        $region55: #{tpu_custom_call.1} parent=11 // pred_region
          %s438 = ssub.s32 2048, 2048
          %439 = vsyncadd [#allocation15], %s438
          %s440 = sshll.u32 [#allocation14], 4
          %s441 = int_to_ptr.vmem [resolvable:$true] %s440
          %446 = dma.hbm_to_vmem [thread:$0]  %s11, 2048, %s441, [#allocation15], 64, 64, 4
        $region56: #{tpu_custom_call.1} parent=11 // pred_fallthru
          _
        // Predicated region
        $region57: #{tpu_custom_call.1} parent=11 // pred_check
          %p447 = pneg %p307
        $region58: #{tpu_custom_call.1} parent=11 // pred_check_branch
          %449 = sbr.rel (%p447) target = $region60
        $region59: #{tpu_custom_call.1} parent=11 // pred_region
          _
        $region60: #{tpu_custom_call.1} parent=11 // pred_fallthru
          _
      $region12: #{tpu_custom_call.1} parent=5 // pred_fallthru
        _
      %p450 = scmp.lt.s32.totalorder %s29, 10
      // Predicated region
      $region61: #{tpu_custom_call.1} parent=5 // pred_check
        %p451 = pneg %p450
      $region62: #{tpu_custom_call.1} parent=5 // pred_check_branch
        %453 = sbr.rel (%p451) target = $region64
      $region63: #{tpu_custom_call.1} parent=5 // pred_region
        // Predicated region
        $region65: #{tpu_custom_call.1} parent=63 // pred_check
          %p454 = pneg %p49
        $region66: #{tpu_custom_call.1} parent=63 // pred_check_branch
          %456 = sbr.rel (%p454) target = $region68
        $region67: #{tpu_custom_call.1} parent=63 // pred_region
          %s457 = sand.u32 %s39, 1
          %s458 = scalar_lea.sflag [#allocation3], %s457
          %s459 = sand.u32 %s39, 1
          %s460 = smul.addr %s459, 32
          %s461 = scalar_lea.vmem [#allocation2], %s460
          %s463 = ssub.s32 512, 512
          %464 = vsyncadd %s458, %s463
          %s465 = smul.addr %s29, 8
          %s466 = smul.addr %s465, 64
          %s467 = scalar_lea.hbm %s0, %s466
          %s468 = sshll.u32 %s461, 4
          %s469 = int_to_ptr.vmem [resolvable:$true] %s468
          %474 = dma.hbm_to_vmem [thread:$0]  %s467, 512, %s469, %s458, 64, 64, 4
        $region68: #{tpu_custom_call.1} parent=63 // pred_fallthru
          _
      $region64: #{tpu_custom_call.1} parent=5 // pred_fallthru
        _
      %p475 = scmp.le.s32.totalorder 1, %s29
      %p476 = scmp.lt.s32.totalorder %s29, 11
      %p477 = pnand %p475, %p476
      %p478 = pneg %p477
      // Predicated region
      $region69: #{tpu_custom_call.1} parent=5 // pred_check
        _
      $region70: #{tpu_custom_call.1} parent=5 // pred_check_branch
        %480 = sbr.rel (%p477) target = $region72
      $region71: #{tpu_custom_call.1} parent=5 // pred_region
        %s481 = ssub.s32 %s29, 1
        %s482 = sand.u32 %s42, 1
        %s483 = scalar_lea.sflag [#allocation3], %s482
        %s484 = sand.u32 %s42, 1
        %s485 = smul.addr %s484, 32
        %s486 = scalar_lea.vmem [#allocation2], %s485
        // Predicated region
        $region73: #{tpu_custom_call.1} parent=71 // pred_check
          %p487 = pneg %p55
        $region74: #{tpu_custom_call.1} parent=71 // pred_check_branch
          %489 = sbr.rel (%p487) target = $region76
        $region75: #{tpu_custom_call.1} parent=71 // pred_region
          %490 = dma.done %s483, 512
        $region76: #{tpu_custom_call.1} parent=71 // pred_fallthru
          _
        // Predicated region
        $region77: #{tpu_custom_call.1} parent=71 // pred_check
          %p491 = pneg %p76
        $region78: #{tpu_custom_call.1} parent=71 // pred_check_branch
          %493 = sbr.rel (%p491) target = $region80
        $region79: #{tpu_custom_call.1} parent=71 // pred_region
          %494 = dma.done [#allocation6], 1024
        $region80: #{tpu_custom_call.1} parent=71 // pred_fallthru
          _
        // Predicated region
        $region81: #{tpu_custom_call.1} parent=71 // pred_check
          %p495 = pneg %p118
        $region82: #{tpu_custom_call.1} parent=71 // pred_check_branch
          %497 = sbr.rel (%p495) target = $region84
        $region83: #{tpu_custom_call.1} parent=71 // pred_region
          %498 = dma.done [#allocation6], 16
        $region84: #{tpu_custom_call.1} parent=71 // pred_fallthru
          _
        // Predicated region
        $region85: #{tpu_custom_call.1} parent=71 // pred_check
          %p499 = pneg %p139
        $region86: #{tpu_custom_call.1} parent=71 // pred_check_branch
          %501 = sbr.rel (%p499) target = $region88
        $region87: #{tpu_custom_call.1} parent=71 // pred_region
          %502 = dma.done [#allocation9], 16
        $region88: #{tpu_custom_call.1} parent=71 // pred_fallthru
          _
        // Predicated region
        $region89: #{tpu_custom_call.1} parent=71 // pred_check
          %p503 = pneg %p160
        $region90: #{tpu_custom_call.1} parent=71 // pred_check_branch
          %505 = sbr.rel (%p503) target = $region92
        $region91: #{tpu_custom_call.1} parent=71 // pred_region
          %506 = dma.done [#allocation9], 2048
        $region92: #{tpu_custom_call.1} parent=71 // pred_fallthru
          _
        // Predicated region
        $region93: #{tpu_custom_call.1} parent=71 // pred_check
          %p507 = pneg %p181
        $region94: #{tpu_custom_call.1} parent=71 // pred_check_branch
          %509 = sbr.rel (%p507) target = $region96
        $region95: #{tpu_custom_call.1} parent=71 // pred_region
          %510 = dma.done [#allocation12], 2048
        $region96: #{tpu_custom_call.1} parent=71 // pred_fallthru
          _
        // Predicated region
        $region97: #{tpu_custom_call.1} parent=71 // pred_check
          %p511 = pneg %p265
        $region98: #{tpu_custom_call.1} parent=71 // pred_check_branch
          %513 = sbr.rel (%p511) target = $region100
        $region99: #{tpu_custom_call.1} parent=71 // pred_region
          %514 = dma.done [#allocation12], 8192
        $region100: #{tpu_custom_call.1} parent=71 // pred_fallthru
          _
        // Predicated region
        $region101: #{tpu_custom_call.1} parent=71 // pred_check
          %p515 = pneg %p286
        $region102: #{tpu_custom_call.1} parent=71 // pred_check_branch
          %517 = sbr.rel (%p515) target = $region104
        $region103: #{tpu_custom_call.1} parent=71 // pred_region
          %518 = dma.done [#allocation15], 2048
        $region104: #{tpu_custom_call.1} parent=71 // pred_fallthru
          _
        %s519 = sand.u32 %s42, 1
        %s520 = scalar_lea.sflag [#allocation3], %s519
        %s521 = sand.u32 %s42, 1
        %s522 = smul.addr %s521, 32
        %s523 = scalar_lea.vmem [#allocation2], %s522
        %p524 = pneg %p55
        %p525 = pneg %p52
        %p526 = pneg %p76
        %p527 = pneg %p73
        %p528 = pneg %p97
        %p529 = pneg %p94
        %p530 = pneg %p118
        %p531 = pneg %p115
        %p532 = pneg %p139
        %p533 = pneg %p136
        %p534 = pneg %p160
        %p535 = pneg %p157
        %p536 = pneg %p181
        %p537 = pneg %p178
        %p538 = pneg %p202
        %p539 = pneg %p199
        %p540 = pneg %p223
        %p541 = pneg %p220
        %p542 = pneg %p244
        %p543 = pneg %p241
        %p544 = pneg %p265
        %p545 = pneg %p262
        %p546 = pneg %p286
        %p547 = pneg %p283
        %p548 = pneg %p307
        %p549 = pneg %p304
        %p550 = pneg %p333
        %p551 = pneg %p330
        %s552 = sand.u32 %s320, 1
        %s553 = scalar_lea.sflag [#allocation4], %s552
        %s554 = sand.u32 %s320, 1
        %s555 = scalar_lea.vmem [#allocation16], %s554
        %v557 = vld [vmem:[%s486] sm:$0xf]
        %v558 = vld [vmem:[%s486 + $0x4] sm:$0xf]
        %v559 = vld [vmem:[%s486 + $0x8] sm:$0xf]
        %v560 = vld [vmem:[%s486 + $0xc] sm:$0xf]
        %v561 = vld [vmem:[%s486 + $0x10] sm:$0xf]
        %v562 = vld [vmem:[%s486 + $0x14] sm:$0xf]
        %v563 = vld [vmem:[%s486 + $0x18] sm:$0xf]
        %v564 = vld [vmem:[%s486 + $0x1c] sm:$0xf]
        %v565 = vld [vmem:[#allocation5] sm:$0xf]
        %v566 = vld [vmem:[#allocation5 + $0x4] sm:$0xf]
        %v567 = vld [vmem:[#allocation5 + $0x8] sm:$0xf]
        %v568 = vld [vmem:[#allocation5 + $0xc] sm:$0xf]
        %v569 = vld [vmem:[#allocation5 + $0x10] sm:$0xf]
        %v570 = vld [vmem:[#allocation5 + $0x14] sm:$0xf]
        %v571 = vld [vmem:[#allocation5 + $0x18] sm:$0xf]
        %v572 = vld [vmem:[#allocation5 + $0x1c] sm:$0xf]
        %v573 = vld [vmem:[#allocation5 + $0x20] sm:$0xf]
        %v574 = vld [vmem:[#allocation5 + $0x24] sm:$0xf]
        %v575 = vld [vmem:[#allocation5 + $0x28] sm:$0xf]
        %v576 = vld [vmem:[#allocation5 + $0x2c] sm:$0xf]
        %v577 = vld [vmem:[#allocation5 + $0x30] sm:$0xf]
        %v578 = vld [vmem:[#allocation5 + $0x34] sm:$0xf]
        %v579 = vld [vmem:[#allocation5 + $0x38] sm:$0xf]
        %v580 = vld [vmem:[#allocation5 + $0x3c] sm:$0xf]
        %v581 = vld [vmem:[%s2] sm:$0x1]
        %v583 = vlaneseq
        %v584 = vshrl.u32 %v583, 7
        %v585 = vsub.s32 0, %v584
        %v586 = vrot.slane %v581, %v585
        %v596 = vunpack.c.l.b16 %v557
        %v597 = vunpack.c.l.b16 %v558
        %v598 = vunpack.c.l.b16 %v559
        %v599 = vunpack.c.l.b16 %v560
        %v600 = vunpack.c.l.b16 %v561
        %v601 = vunpack.c.l.b16 %v562
        %v602 = vunpack.c.l.b16 %v563
        %v603 = vunpack.c.l.b16 %v564
        %v604 = vpack.c.b16 %v597, %v596
        %v605 = vpack.c.b16 %v599, %v598
        %v606 = vpack.c.b16 %v601, %v600
        %v607 = vpack.c.b16 %v603, %v602
        %v628 = vunpack.c.l.b16 %v565
        %v629 = vunpack.c.l.b16 %v566
        %v630 = vunpack.c.l.b16 %v567
        %v631 = vunpack.c.l.b16 %v568
        %v632 = vunpack.c.l.b16 %v569
        %v633 = vunpack.c.l.b16 %v570
        %v634 = vunpack.c.l.b16 %v571
        %v635 = vunpack.c.l.b16 %v572
        %v636 = vunpack.c.l.b16 %v573
        %v637 = vunpack.c.l.b16 %v574
        %v638 = vunpack.c.l.b16 %v575
        %v639 = vunpack.c.l.b16 %v576
        %v640 = vunpack.c.l.b16 %v577
        %v641 = vunpack.c.l.b16 %v578
        %v642 = vunpack.c.l.b16 %v579
        %v643 = vunpack.c.l.b16 %v580
        %v644 = vpack.c.b16 %v629, %v628
        %v645 = vpack.c.b16 %v631, %v630
        %v646 = vpack.c.b16 %v633, %v632
        %v647 = vpack.c.b16 %v635, %v634
        %v648 = vpack.c.b16 %v637, %v636
        %v649 = vpack.c.b16 %v639, %v638
        %v650 = vpack.c.b16 %v641, %v640
        %v651 = vpack.c.b16 %v643, %v642
        %660 = vmatprep.subr.bf16.mxu0 0
        %661 = vmatpush1.bf16.msra.mxu0 %v651
        %662 = vmatprep.subr.bf16.mxu0 0
        %663 = vmatpush1.bf16.msra.mxu0 %v650
        %664 = vmatprep.subr.bf16.mxu0 0
        %665 = vmatpush1.bf16.msra.mxu0 %v649
        %666 = vmatprep.subr.bf16.mxu0 0
        %667 = vmatpush1.bf16.msra.mxu0 %v648
        %668 = vmatprep.subr.bf16.mxu0 0
        %669 = vmatpush1.bf16.msra.mxu0 %v647
        %670 = vmatprep.subr.bf16.mxu0 0
        %671 = vmatpush1.bf16.msra.mxu0 %v646
        %672 = vmatprep.subr.bf16.mxu0 0
        %673 = vmatpush1.bf16.msra.mxu0 %v645
        %674 = vmatprep.subr.bf16.mxu0 0
        %675 = vmatpush1.bf16.msra.mxu0 %v644
        %676 = vmatprep.subr.bf16.mxu0 0
        %677 = vmatpush2.bf16.msra.mxu0 0
        %678 = vmatprep.subr.bf16.mxu0 0
        %679 = vmatpush2.bf16.msra.mxu0 0
        %680 = vmatprep.subr.bf16.mxu0 0
        %681 = vmatpush2.bf16.msra.mxu0 0
        %682 = vmatprep.subr.bf16.mxu0 0
        %683 = vmatpush2.bf16.msra.mxu0 0
        %684 = vmatprep.subr.bf16.mxu0 0
        %685 = vmatpush2.bf16.msra.mxu0 0
        %686 = vmatprep.subr.bf16.mxu0 0
        %687 = vmatpush2.bf16.msra.mxu0 0
        %688 = vmatprep.subr.bf16.mxu0 0
        %689 = vmatpush2.bf16.msra.mxu0 0
        %690 = vmatprep.subr.bf16.mxu0 0
        %691 = vmatpush2.bf16.msra.mxu0 0
        %692 = vmatprep.mubr.bf16.mxu0 0
        %693 = vmatmul.mubr.bf16.gmra.mxu0 %v604
        %v694 = vpop.f32.mrf.mxu0
        %v695 = vadd.f32 %v586, %v694
        %v696 = vpop.f32.mrf.mxu0
        %v697 = vpop.f32.mrf.mxu0
        %v698 = vadd.f32 %v586, %v697
        %v699 = vpop.f32.mrf.mxu0
        %700 = vmatprep.mubr.bf16.mxu0 0
        %701 = vmatmul.mubr.bf16.gmra.mxu0 %v605
        %v702 = vpop.f32.mrf.mxu0
        %v703 = vadd.f32 %v586, %v702
        %v704 = vpop.f32.mrf.mxu0
        %v705 = vpop.f32.mrf.mxu0
        %v706 = vadd.f32 %v586, %v705
        %v707 = vpop.f32.mrf.mxu0
        %708 = vmatprep.mubr.bf16.mxu0 0
        %709 = vmatmul.mubr.bf16.gmra.mxu0 %v606
        %v710 = vpop.f32.mrf.mxu0
        %v711 = vadd.f32 %v586, %v710
        %v712 = vpop.f32.mrf.mxu0
        %v713 = vpop.f32.mrf.mxu0
        %v714 = vadd.f32 %v586, %v713
        %v715 = vpop.f32.mrf.mxu0
        %716 = vmatprep.mubr.bf16.mxu0 0
        %717 = vmatmul.mubr.bf16.gmra.mxu0 %v607
        %v718 = vpop.f32.mrf.mxu0
        %v719 = vadd.f32 %v586, %v718
        %v720 = vpop.f32.mrf.mxu0
        %v721 = vpop.f32.mrf.mxu0
        %v722 = vadd.f32 %v586, %v721
        %v723 = vpop.f32.mrf.mxu0
        %724 = vdwg.mxu0
        %v725 = vld [vmem:[#allocation7] sm:$0x1]
        %v726 = vld [vmem:[#allocation8] sm:$0x1]
        %v727 = vld [vmem:[#allocation10] sm:$0xff]
        %v728 = vld [vmem:[#allocation10 + $0x8] sm:$0xff]
        %v729 = vld [vmem:[#allocation10 + $0x10] sm:$0xff]
        %v730 = vld [vmem:[#allocation10 + $0x18] sm:$0xff]
        %v731 = vld [vmem:[#allocation10 + $0x20] sm:$0xff]
        %v732 = vld [vmem:[#allocation10 + $0x28] sm:$0xff]
        %v733 = vld [vmem:[#allocation10 + $0x30] sm:$0xff]
        %v734 = vld [vmem:[#allocation10 + $0x38] sm:$0xff]
        %v735 = vld [vmem:[#allocation10 + $0x40] sm:$0xff]
        %v736 = vld [vmem:[#allocation10 + $0x48] sm:$0xff]
        %v737 = vld [vmem:[#allocation10 + $0x50] sm:$0xff]
        %v738 = vld [vmem:[#allocation10 + $0x58] sm:$0xff]
        %v739 = vld [vmem:[#allocation10 + $0x60] sm:$0xff]
        %v740 = vld [vmem:[#allocation10 + $0x68] sm:$0xff]
        %v741 = vld [vmem:[#allocation10 + $0x70] sm:$0xff]
        %v742 = vld [vmem:[#allocation10 + $0x78] sm:$0xff]
        %v743 = vadd.f32 %v695, %v698
        %v744 = vadd.f32 %v743, %v703
        %v745 = vadd.f32 %v744, %v706
        %v746 = vadd.f32 %v745, %v711
        %v747 = vadd.f32 %v746, %v714
        %v748 = vadd.f32 %v747, %v719
        %v749 = vadd.f32 %v748, %v722
        %v750 = vrot.slane %v749, 4
        %v751 = vadd.f32 %v749, %v750
        %v752 = vrot.slane %v751, 2
        %v753 = vadd.f32 %v751, %v752
        %v754 = vrot.slane %v753, 1
        %v755 = vadd.f32 %v753, %v754
        %756 = vmatprep.subr.mxu0 0.0
        %757 = vmatpush1.msra.mxu0 %v742
        %758 = vmatprep.subr.mxu0 0.0
        %759 = vmatpush1.msra.mxu0 %v741
        %760 = vmatprep.subr.mxu0 0.0
        %761 = vmatpush1.msra.mxu0 %v740
        %762 = vmatprep.subr.mxu0 0.0
        %763 = vmatpush1.msra.mxu0 %v739
        %764 = vmatprep.subr.mxu0 0.0
        %765 = vmatpush1.msra.mxu0 %v738
        %766 = vmatprep.subr.mxu0 0.0
        %767 = vmatpush1.msra.mxu0 %v737
        %768 = vmatprep.subr.mxu0 0.0
        %769 = vmatpush1.msra.mxu0 %v736
        %770 = vmatprep.subr.mxu0 0.0
        %771 = vmatpush1.msra.mxu0 %v735
        %772 = vmatprep.subr.mxu0 0.0
        %773 = vmatpush1.msra.mxu0 %v734
        %774 = vmatprep.subr.mxu0 0.0
        %775 = vmatpush1.msra.mxu0 %v733
        %776 = vmatprep.subr.mxu0 0.0
        %777 = vmatpush1.msra.mxu0 %v732
        %778 = vmatprep.subr.mxu0 0.0
        %779 = vmatpush1.msra.mxu0 %v731
        %780 = vmatprep.subr.mxu0 0.0
        %781 = vmatpush1.msra.mxu0 %v730
        %782 = vmatprep.subr.mxu0 0.0
        %783 = vmatpush1.msra.mxu0 %v729
        %784 = vmatprep.subr.mxu0 0.0
        %785 = vmatpush1.msra.mxu0 %v728
        %786 = vmatprep.subr.mxu0 0.0
        %787 = vmatpush1.msra.mxu0 %v727
        %788 = vmatprep.subr.mxu0 0.0
        %789 = vmatpush2.msra.mxu0 0.0
        %790 = vmatprep.subr.mxu0 0.0
        %791 = vmatpush2.msra.mxu0 0.0
        %792 = vmatprep.subr.mxu0 0.0
        %793 = vmatpush2.msra.mxu0 0.0
        %794 = vmatprep.subr.mxu0 0.0
        %795 = vmatpush2.msra.mxu0 0.0
        %796 = vmatprep.subr.mxu0 0.0
        %797 = vmatpush2.msra.mxu0 0.0
        %798 = vmatprep.subr.mxu0 0.0
        %799 = vmatpush2.msra.mxu0 0.0
        %800 = vmatprep.subr.mxu0 0.0
        %801 = vmatpush2.msra.mxu0 0.0
        %802 = vmatprep.subr.mxu0 0.0
        %803 = vmatpush2.msra.mxu0 0.0
        %804 = vmatprep.subr.mxu0 0.0
        %805 = vmatpush2.msra.mxu0 0.0
        %806 = vmatprep.subr.mxu0 0.0
        %807 = vmatpush2.msra.mxu0 0.0
        %808 = vmatprep.subr.mxu0 0.0
        %809 = vmatpush2.msra.mxu0 0.0
        %810 = vmatprep.subr.mxu0 0.0
        %811 = vmatpush2.msra.mxu0 0.0
        %812 = vmatprep.subr.mxu0 0.0
        %813 = vmatpush2.msra.mxu0 0.0
        %814 = vmatprep.subr.mxu0 0.0
        %815 = vmatpush2.msra.mxu0 0.0
        %816 = vmatprep.subr.mxu0 0.0
        %817 = vmatpush2.msra.mxu0 0.0
        %818 = vmatprep.subr.mxu0 0.0
        %819 = vmatpush2.msra.mxu0 0.0
        %820 = vmatprep.mubr.f32.mxu0 0.0
        %821 = vmatmul.mubr.f32.gmra.mxu0 %v755
        %v822 = vpop.f32.mrf.mxu0
        %v823 = vadd.f32 0.0, %v822
        %v824 = vpop.f32.mrf.mxu0
        %825 = vdwg.mxu0
        %v826 = vmul.f32 %v823, 0.015625
        %v827 = vlaneseq
        %v828 = vshrl.u32 %v827, 7
        %v829 = vsub.s32 0, %v828
        %v830 = vrot.slane %v826, %v829
        %v831 = vsub.f32 %v695, %v830
        %v832 = vsub.f32 %v698, %v830
        %v833 = vsub.f32 %v703, %v830
        %v834 = vsub.f32 %v706, %v830
        %v835 = vsub.f32 %v711, %v830
        %v836 = vsub.f32 %v714, %v830
        %v837 = vsub.f32 %v719, %v830
        %v838 = vsub.f32 %v722, %v830
        %v839 = vmul.f32 %v831, %v831
        %v840 = vmul.f32 %v832, %v832
        %v841 = vmul.f32 %v833, %v833
        %v842 = vmul.f32 %v834, %v834
        %v843 = vmul.f32 %v835, %v835
        %v844 = vmul.f32 %v836, %v836
        %v845 = vmul.f32 %v837, %v837
        %v846 = vmul.f32 %v838, %v838
        %v847 = vadd.f32 %v839, %v840
        %v848 = vadd.f32 %v847, %v841
        %v849 = vadd.f32 %v848, %v842
        %v850 = vadd.f32 %v849, %v843
        %v851 = vadd.f32 %v850, %v844
        %v852 = vadd.f32 %v851, %v845
        %v853 = vadd.f32 %v852, %v846
        %v854 = vrot.slane %v853, 4
        %v855 = vadd.f32 %v853, %v854
        %v856 = vrot.slane %v855, 2
        %v857 = vadd.f32 %v855, %v856
        %v858 = vrot.slane %v857, 1
        %v859 = vadd.f32 %v857, %v858
        %860 = vmatprep.subr.mxu0 0.0
        %861 = vmatpush1.msra.mxu0 %v742
        %862 = vmatprep.subr.mxu0 0.0
        %863 = vmatpush1.msra.mxu0 %v741
        %864 = vmatprep.subr.mxu0 0.0
        %865 = vmatpush1.msra.mxu0 %v740
        %866 = vmatprep.subr.mxu0 0.0
        %867 = vmatpush1.msra.mxu0 %v739
        %868 = vmatprep.subr.mxu0 0.0
        %869 = vmatpush1.msra.mxu0 %v738
        %870 = vmatprep.subr.mxu0 0.0
        %871 = vmatpush1.msra.mxu0 %v737
        %872 = vmatprep.subr.mxu0 0.0
        %873 = vmatpush1.msra.mxu0 %v736
        %874 = vmatprep.subr.mxu0 0.0
        %875 = vmatpush1.msra.mxu0 %v735
        %876 = vmatprep.subr.mxu0 0.0
        %877 = vmatpush1.msra.mxu0 %v734
        %878 = vmatprep.subr.mxu0 0.0
        %879 = vmatpush1.msra.mxu0 %v733
        %880 = vmatprep.subr.mxu0 0.0
        %881 = vmatpush1.msra.mxu0 %v732
        %882 = vmatprep.subr.mxu0 0.0
        %883 = vmatpush1.msra.mxu0 %v731
        %884 = vmatprep.subr.mxu0 0.0
        %885 = vmatpush1.msra.mxu0 %v730
        %886 = vmatprep.subr.mxu0 0.0
        %887 = vmatpush1.msra.mxu0 %v729
        %888 = vmatprep.subr.mxu0 0.0
        %889 = vmatpush1.msra.mxu0 %v728
        %890 = vmatprep.subr.mxu0 0.0
        %891 = vmatpush1.msra.mxu0 %v727
        %892 = vmatprep.subr.mxu0 0.0
        %893 = vmatpush2.msra.mxu0 0.0
        %894 = vmatprep.subr.mxu0 0.0
        %895 = vmatpush2.msra.mxu0 0.0
        %896 = vmatprep.subr.mxu0 0.0
        %897 = vmatpush2.msra.mxu0 0.0
        %898 = vmatprep.subr.mxu0 0.0
        %899 = vmatpush2.msra.mxu0 0.0
        %900 = vmatprep.subr.mxu0 0.0
        %901 = vmatpush2.msra.mxu0 0.0
        %902 = vmatprep.subr.mxu0 0.0
        %903 = vmatpush2.msra.mxu0 0.0
        %904 = vmatprep.subr.mxu0 0.0
        %905 = vmatpush2.msra.mxu0 0.0
        %906 = vmatprep.subr.mxu0 0.0
        %907 = vmatpush2.msra.mxu0 0.0
        %908 = vmatprep.subr.mxu0 0.0
        %909 = vmatpush2.msra.mxu0 0.0
        %910 = vmatprep.subr.mxu0 0.0
        %911 = vmatpush2.msra.mxu0 0.0
        %912 = vmatprep.subr.mxu0 0.0
        %913 = vmatpush2.msra.mxu0 0.0
        %914 = vmatprep.subr.mxu0 0.0
        %915 = vmatpush2.msra.mxu0 0.0
        %916 = vmatprep.subr.mxu0 0.0
        %917 = vmatpush2.msra.mxu0 0.0
        %918 = vmatprep.subr.mxu0 0.0
        %919 = vmatpush2.msra.mxu0 0.0
        %920 = vmatprep.subr.mxu0 0.0
        %921 = vmatpush2.msra.mxu0 0.0
        %922 = vmatprep.subr.mxu0 0.0
        %923 = vmatpush2.msra.mxu0 0.0
        %924 = vmatprep.mubr.f32.mxu0 0.0
        %925 = vmatmul.mubr.f32.gmra.mxu0 %v859
        %v926 = vpop.f32.mrf.mxu0
        %v927 = vadd.f32 0.0, %v926
        %v928 = vpop.f32.mrf.mxu0
        %929 = vdwg.mxu0
        %v930 = vmul.f32 %v927, 0.015625
        %v931 = vadd.f32 %v930, 1e-05
        %v932 = vrsqrt.pop %v931
        %v933 = vlaneseq
        %v934 = vshrl.u32 %v933, 7
        %v935 = vsub.s32 0, %v934
        %v936 = vrot.slane %v932, %v935
        %v937 = vmul.f32 %v831, %v936
        %v938 = vmul.f32 %v832, %v936
        %v939 = vmul.f32 %v833, %v936
        %v940 = vmul.f32 %v834, %v936
        %v941 = vmul.f32 %v835, %v936
        %v942 = vmul.f32 %v836, %v936
        %v943 = vmul.f32 %v837, %v936
        %v944 = vmul.f32 %v838, %v936
        %v946 = vlaneseq
        %v947 = vshrl.u32 %v946, 7
        %v948 = vsub.s32 0, %v947
        %v949 = vrot.slane %v725, %v948
        %v951 = vmul.f32 %v937, %v949
        %v952 = vmul.f32 %v938, %v949
        %v953 = vmul.f32 %v939, %v949
        %v954 = vmul.f32 %v940, %v949
        %v955 = vmul.f32 %v941, %v949
        %v956 = vmul.f32 %v942, %v949
        %v957 = vmul.f32 %v943, %v949
        %v958 = vmul.f32 %v944, %v949
        %v960 = vlaneseq
        %v961 = vshrl.u32 %v960, 7
        %v962 = vsub.s32 0, %v961
        %v963 = vrot.slane %v726, %v962
        %v965 = vadd.f32 %v951, %v963
        %v966 = vadd.f32 %v952, %v963
        %v967 = vadd.f32 %v953, %v963
        %v968 = vadd.f32 %v954, %v963
        %v969 = vadd.f32 %v955, %v963
        %v970 = vadd.f32 %v956, %v963
        %v971 = vadd.f32 %v957, %v963
        %v972 = vadd.f32 %v958, %v963
        %v973 = vxor.u32 %v965, 2147483648
        %v974 = vxor.u32 %v966, 2147483648
        %v975 = vxor.u32 %v967, 2147483648
        %v976 = vxor.u32 %v968, 2147483648
        %v977 = vxor.u32 %v969, 2147483648
        %v978 = vxor.u32 %v970, 2147483648
        %v979 = vxor.u32 %v971, 2147483648
        %v980 = vxor.u32 %v972, 2147483648
        %v981 = vmul.f32 %v973, 1.442695
        %v982 = vpow.pop %v981
        %v983 = vmul.f32 %v974, 1.442695
        %v984 = vpow.pop %v983
        %v985 = vmul.f32 %v975, 1.442695
        %v986 = vpow.pop %v985
        %v987 = vmul.f32 %v976, 1.442695
        %v988 = vpow.pop %v987
        %v989 = vmul.f32 %v977, 1.442695
        %v990 = vpow.pop %v989
        %v991 = vmul.f32 %v978, 1.442695
        %v992 = vpow.pop %v991
        %v993 = vmul.f32 %v979, 1.442695
        %v994 = vpow.pop %v993
        %v995 = vmul.f32 %v980, 1.442695
        %v996 = vpow.pop %v995
        %v997 = vadd.f32 %v982, 1.0
        %v998 = vadd.f32 %v984, 1.0
        %v999 = vadd.f32 %v986, 1.0
        %v1000 = vadd.f32 %v988, 1.0
        %v1001 = vadd.f32 %v990, 1.0
        %v1002 = vadd.f32 %v992, 1.0
        %v1003 = vadd.f32 %v994, 1.0
        %v1004 = vadd.f32 %v996, 1.0
        %v1005 = vrcp.pop %v997
        %v1006 = vmul.f32 1.0, %v1005
        %v1007 = vrcp.pop %v998
        %v1008 = vmul.f32 1.0, %v1007
        %v1009 = vrcp.pop %v999
        %v1010 = vmul.f32 1.0, %v1009
        %v1011 = vrcp.pop %v1000
        %v1012 = vmul.f32 1.0, %v1011
        %v1013 = vrcp.pop %v1001
        %v1014 = vmul.f32 1.0, %v1013
        %v1015 = vrcp.pop %v1002
        %v1016 = vmul.f32 1.0, %v1015
        %v1017 = vrcp.pop %v1003
        %v1018 = vmul.f32 1.0, %v1017
        %v1019 = vrcp.pop %v1004
        %v1020 = vmul.f32 1.0, %v1019
        %v1021 = vmul.f32 %v965, %v1006
        %v1022 = vmul.f32 %v966, %v1008
        %v1023 = vmul.f32 %v967, %v1010
        %v1024 = vmul.f32 %v968, %v1012
        %v1025 = vmul.f32 %v969, %v1014
        %v1026 = vmul.f32 %v970, %v1016
        %v1027 = vmul.f32 %v971, %v1018
        %v1028 = vmul.f32 %v972, %v1020
        %v1029 = vpack.c.bf16 %v1022, %v1021
        %v1030 = vpack.c.bf16 %v1024, %v1023
        %v1031 = vpack.c.bf16 %v1026, %v1025
        %v1032 = vpack.c.bf16 %v1028, %v1027
        %v1033 = vld [vmem:[#allocation11] sm:$0xff]
        %v1034 = vld [vmem:[#allocation11 + $0x8] sm:$0xff]
        %v1035 = vld [vmem:[#allocation11 + $0x10] sm:$0xff]
        %v1036 = vld [vmem:[#allocation11 + $0x18] sm:$0xff]
        %v1037 = vld [vmem:[#allocation11 + $0x20] sm:$0xff]
        %v1038 = vld [vmem:[#allocation11 + $0x28] sm:$0xff]
        %v1039 = vld [vmem:[#allocation11 + $0x30] sm:$0xff]
        %v1040 = vld [vmem:[#allocation11 + $0x38] sm:$0xff]
        %v1041 = vld [vmem:[#allocation11 + $0x40] sm:$0xff]
        %v1042 = vld [vmem:[#allocation11 + $0x48] sm:$0xff]
        %v1043 = vld [vmem:[#allocation11 + $0x50] sm:$0xff]
        %v1044 = vld [vmem:[#allocation11 + $0x58] sm:$0xff]
        %v1045 = vld [vmem:[#allocation11 + $0x60] sm:$0xff]
        %v1046 = vld [vmem:[#allocation11 + $0x68] sm:$0xff]
        %v1047 = vld [vmem:[#allocation11 + $0x70] sm:$0xff]
        %v1048 = vld [vmem:[#allocation11 + $0x78] sm:$0xff]
        %v1049 = vld [vmem:[%s7] sm:$0x3]
        %v1051 = vlaneseq
        %v1052 = vshrl.u32 %v1051, 7
        %v1053 = vsub.s32 0, %v1052
        %v1054 = vrot.slane %v1049, %v1053
        %v1055 = vlaneseq
        %v1056 = vshrl.u32 %v1055, 7
        %v1057 = vsub.s32 1, %v1056
        %v1058 = vrot.slane %v1049, %v1057
        %v1077 = vunpack.c.l.b16 %v1033
        %v1078 = vunpack.c.h.b16 %v1033
        %v1079 = vunpack.c.l.b16 %v1034
        %v1080 = vunpack.c.h.b16 %v1034
        %v1081 = vunpack.c.l.b16 %v1035
        %v1082 = vunpack.c.h.b16 %v1035
        %v1083 = vunpack.c.l.b16 %v1036
        %v1084 = vunpack.c.h.b16 %v1036
        %v1085 = vunpack.c.l.b16 %v1037
        %v1086 = vunpack.c.h.b16 %v1037
        %v1087 = vunpack.c.l.b16 %v1038
        %v1088 = vunpack.c.h.b16 %v1038
        %v1089 = vunpack.c.l.b16 %v1039
        %v1090 = vunpack.c.h.b16 %v1039
        %v1091 = vunpack.c.l.b16 %v1040
        %v1092 = vunpack.c.h.b16 %v1040
        %v1093 = vunpack.c.l.b16 %v1041
        %v1094 = vunpack.c.h.b16 %v1041
        %v1095 = vunpack.c.l.b16 %v1042
        %v1096 = vunpack.c.h.b16 %v1042
        %v1097 = vunpack.c.l.b16 %v1043
        %v1098 = vunpack.c.h.b16 %v1043
        %v1099 = vunpack.c.l.b16 %v1044
        %v1100 = vunpack.c.h.b16 %v1044
        %v1101 = vunpack.c.l.b16 %v1045
        %v1102 = vunpack.c.h.b16 %v1045
        %v1103 = vunpack.c.l.b16 %v1046
        %v1104 = vunpack.c.h.b16 %v1046
        %v1105 = vunpack.c.l.b16 %v1047
        %v1106 = vunpack.c.h.b16 %v1047
        %v1107 = vunpack.c.l.b16 %v1048
        %v1108 = vunpack.c.h.b16 %v1048
        %v1109 = vpack.c.b16 %v1079, %v1077
        %v1110 = vpack.c.b16 %v1080, %v1078
        %v1111 = vpack.c.b16 %v1083, %v1081
        %v1112 = vpack.c.b16 %v1084, %v1082
        %v1113 = vpack.c.b16 %v1087, %v1085
        %v1114 = vpack.c.b16 %v1088, %v1086
        %v1115 = vpack.c.b16 %v1091, %v1089
        %v1116 = vpack.c.b16 %v1092, %v1090
        %v1117 = vpack.c.b16 %v1095, %v1093
        %v1118 = vpack.c.b16 %v1096, %v1094
        %v1119 = vpack.c.b16 %v1099, %v1097
        %v1120 = vpack.c.b16 %v1100, %v1098
        %v1121 = vpack.c.b16 %v1103, %v1101
        %v1122 = vpack.c.b16 %v1104, %v1102
        %v1123 = vpack.c.b16 %v1107, %v1105
        %v1124 = vpack.c.b16 %v1108, %v1106
        %1141 = vmatprep.subr.bf16.mxu0 %v1124
        %1142 = vmatpush1.bf16.msra.mxu0 %v1123
        %1143 = vmatprep.subr.bf16.mxu0 %v1122
        %1144 = vmatpush1.bf16.msra.mxu0 %v1121
        %1145 = vmatprep.subr.bf16.mxu0 %v1120
        %1146 = vmatpush1.bf16.msra.mxu0 %v1119
        %1147 = vmatprep.subr.bf16.mxu0 %v1118
        %1148 = vmatpush1.bf16.msra.mxu0 %v1117
        %1149 = vmatprep.subr.bf16.mxu0 %v1116
        %1150 = vmatpush1.bf16.msra.mxu0 %v1115
        %1151 = vmatprep.subr.bf16.mxu0 %v1114
        %1152 = vmatpush1.bf16.msra.mxu0 %v1113
        %1153 = vmatprep.subr.bf16.mxu0 %v1112
        %1154 = vmatpush1.bf16.msra.mxu0 %v1111
        %1155 = vmatprep.subr.bf16.mxu0 %v1110
        %1156 = vmatpush1.bf16.msra.mxu0 %v1109
        %1157 = vmatprep.subr.bf16.mxu0 0
        %1158 = vmatpush2.bf16.msra.mxu0 0
        %1159 = vmatprep.subr.bf16.mxu0 0
        %1160 = vmatpush2.bf16.msra.mxu0 0
        %1161 = vmatprep.subr.bf16.mxu0 0
        %1162 = vmatpush2.bf16.msra.mxu0 0
        %1163 = vmatprep.subr.bf16.mxu0 0
        %1164 = vmatpush2.bf16.msra.mxu0 0
        %1165 = vmatprep.subr.bf16.mxu0 0
        %1166 = vmatpush2.bf16.msra.mxu0 0
        %1167 = vmatprep.subr.bf16.mxu0 0
        %1168 = vmatpush2.bf16.msra.mxu0 0
        %1169 = vmatprep.subr.bf16.mxu0 0
        %1170 = vmatpush2.bf16.msra.mxu0 0
        %1171 = vmatprep.subr.bf16.mxu0 0
        %1172 = vmatpush2.bf16.msra.mxu0 0
        %1173 = vmatprep.mubr.bf16.mxu0 0
        %1174 = vmatmul.mubr.bf16.gmra.mxu0 %v1029
        %v1175 = vpop.f32.mrf.mxu0
        %v1176 = vadd.f32 %v1054, %v1175
        %v1177 = vpop.f32.mrf.mxu0
        %v1178 = vadd.f32 %v1058, %v1177
        %v1179 = vpop.f32.mrf.mxu0
        %v1180 = vadd.f32 %v1054, %v1179
        %v1181 = vpop.f32.mrf.mxu0
        %v1182 = vadd.f32 %v1058, %v1181
        %1183 = vmatprep.mubr.bf16.mxu0 0
        %1184 = vmatmul.mubr.bf16.gmra.mxu0 %v1030
        %v1185 = vpop.f32.mrf.mxu0
        %v1186 = vadd.f32 %v1054, %v1185
        %v1187 = vpop.f32.mrf.mxu0
        %v1188 = vadd.f32 %v1058, %v1187
        %v1189 = vpop.f32.mrf.mxu0
        %v1190 = vadd.f32 %v1054, %v1189
        %v1191 = vpop.f32.mrf.mxu0
        %v1192 = vadd.f32 %v1058, %v1191
        %1193 = vmatprep.mubr.bf16.mxu0 0
        %1194 = vmatmul.mubr.bf16.gmra.mxu0 %v1031
        %v1195 = vpop.f32.mrf.mxu0
        %v1196 = vadd.f32 %v1054, %v1195
        %v1197 = vpop.f32.mrf.mxu0
        %v1198 = vadd.f32 %v1058, %v1197
        %v1199 = vpop.f32.mrf.mxu0
        %v1200 = vadd.f32 %v1054, %v1199
        %v1201 = vpop.f32.mrf.mxu0
        %v1202 = vadd.f32 %v1058, %v1201
        %1203 = vmatprep.mubr.bf16.mxu0 0
        %1204 = vmatmul.mubr.bf16.gmra.mxu0 %v1032
        %v1205 = vpop.f32.mrf.mxu0
        %v1206 = vadd.f32 %v1054, %v1205
        %v1207 = vpop.f32.mrf.mxu0
        %v1208 = vadd.f32 %v1058, %v1207
        %v1209 = vpop.f32.mrf.mxu0
        %v1210 = vadd.f32 %v1054, %v1209
        %v1211 = vpop.f32.mrf.mxu0
        %v1212 = vadd.f32 %v1058, %v1211
        %1213 = vdwg.mxu0
        %v1214 = vld [vmem:[%s8] sm:$0x3]
        %v1215 = vld [vmem:[%s9] sm:$0x3]
        %v1216 = vld [vmem:[#allocation13] sm:$0xff]
        %v1217 = vld [vmem:[#allocation13 + $0x8] sm:$0xff]
        %v1218 = vld [vmem:[#allocation13 + $0x10] sm:$0xff]
        %v1219 = vld [vmem:[#allocation13 + $0x18] sm:$0xff]
        %v1220 = vld [vmem:[#allocation13 + $0x20] sm:$0xff]
        %v1221 = vld [vmem:[#allocation13 + $0x28] sm:$0xff]
        %v1222 = vld [vmem:[#allocation13 + $0x30] sm:$0xff]
        %v1223 = vld [vmem:[#allocation13 + $0x38] sm:$0xff]
        %v1224 = vld [vmem:[#allocation13 + $0x40] sm:$0xff]
        %v1225 = vld [vmem:[#allocation13 + $0x48] sm:$0xff]
        %v1226 = vld [vmem:[#allocation13 + $0x50] sm:$0xff]
        %v1227 = vld [vmem:[#allocation13 + $0x58] sm:$0xff]
        %v1228 = vld [vmem:[#allocation13 + $0x60] sm:$0xff]
        %v1229 = vld [vmem:[#allocation13 + $0x68] sm:$0xff]
        %v1230 = vld [vmem:[#allocation13 + $0x70] sm:$0xff]
        %v1231 = vld [vmem:[#allocation13 + $0x78] sm:$0xff]
        %v1232 = vld [vmem:[#allocation13 + $0x80] sm:$0xff]
        %v1233 = vld [vmem:[#allocation13 + $0x88] sm:$0xff]
        %v1234 = vld [vmem:[#allocation13 + $0x90] sm:$0xff]
        %v1235 = vld [vmem:[#allocation13 + $0x98] sm:$0xff]
        %v1236 = vld [vmem:[#allocation13 + $0xa0] sm:$0xff]
        %v1237 = vld [vmem:[#allocation13 + $0xa8] sm:$0xff]
        %v1238 = vld [vmem:[#allocation13 + $0xb0] sm:$0xff]
        %v1239 = vld [vmem:[#allocation13 + $0xb8] sm:$0xff]
        %v1240 = vld [vmem:[#allocation13 + $0xc0] sm:$0xff]
        %v1241 = vld [vmem:[#allocation13 + $0xc8] sm:$0xff]
        %v1242 = vld [vmem:[#allocation13 + $0xd0] sm:$0xff]
        %v1243 = vld [vmem:[#allocation13 + $0xd8] sm:$0xff]
        %v1244 = vld [vmem:[#allocation13 + $0xe0] sm:$0xff]
        %v1245 = vld [vmem:[#allocation13 + $0xe8] sm:$0xff]
        %v1246 = vld [vmem:[#allocation13 + $0xf0] sm:$0xff]
        %v1247 = vld [vmem:[#allocation13 + $0xf8] sm:$0xff]
        %v1248 = vld [vmem:[#allocation13 + $0x100] sm:$0xff]
        %v1249 = vld [vmem:[#allocation13 + $0x108] sm:$0xff]
        %v1250 = vld [vmem:[#allocation13 + $0x110] sm:$0xff]
        %v1251 = vld [vmem:[#allocation13 + $0x118] sm:$0xff]
        %v1252 = vld [vmem:[#allocation13 + $0x120] sm:$0xff]
        %v1253 = vld [vmem:[#allocation13 + $0x128] sm:$0xff]
        %v1254 = vld [vmem:[#allocation13 + $0x130] sm:$0xff]
        %v1255 = vld [vmem:[#allocation13 + $0x138] sm:$0xff]
        %v1256 = vld [vmem:[#allocation13 + $0x140] sm:$0xff]
        %v1257 = vld [vmem:[#allocation13 + $0x148] sm:$0xff]
        %v1258 = vld [vmem:[#allocation13 + $0x150] sm:$0xff]
        %v1259 = vld [vmem:[#allocation13 + $0x158] sm:$0xff]
        %v1260 = vld [vmem:[#allocation13 + $0x160] sm:$0xff]
        %v1261 = vld [vmem:[#allocation13 + $0x168] sm:$0xff]
        %v1262 = vld [vmem:[#allocation13 + $0x170] sm:$0xff]
        %v1263 = vld [vmem:[#allocation13 + $0x178] sm:$0xff]
        %v1264 = vld [vmem:[#allocation13 + $0x180] sm:$0xff]
        %v1265 = vld [vmem:[#allocation13 + $0x188] sm:$0xff]
        %v1266 = vld [vmem:[#allocation13 + $0x190] sm:$0xff]
        %v1267 = vld [vmem:[#allocation13 + $0x198] sm:$0xff]
        %v1268 = vld [vmem:[#allocation13 + $0x1a0] sm:$0xff]
        %v1269 = vld [vmem:[#allocation13 + $0x1a8] sm:$0xff]
        %v1270 = vld [vmem:[#allocation13 + $0x1b0] sm:$0xff]
        %v1271 = vld [vmem:[#allocation13 + $0x1b8] sm:$0xff]
        %v1272 = vld [vmem:[#allocation13 + $0x1c0] sm:$0xff]
        %v1273 = vld [vmem:[#allocation13 + $0x1c8] sm:$0xff]
        %v1274 = vld [vmem:[#allocation13 + $0x1d0] sm:$0xff]
        %v1275 = vld [vmem:[#allocation13 + $0x1d8] sm:$0xff]
        %v1276 = vld [vmem:[#allocation13 + $0x1e0] sm:$0xff]
        %v1277 = vld [vmem:[#allocation13 + $0x1e8] sm:$0xff]
        %v1278 = vld [vmem:[#allocation13 + $0x1f0] sm:$0xff]
        %v1279 = vld [vmem:[#allocation13 + $0x1f8] sm:$0xff]
        %v1280 = vadd.f32 %v1176, %v1180
        %v1281 = vadd.f32 %v1280, %v1186
        %v1282 = vadd.f32 %v1281, %v1190
        %v1283 = vadd.f32 %v1282, %v1196
        %v1284 = vadd.f32 %v1283, %v1200
        %v1285 = vadd.f32 %v1284, %v1206
        %v1286 = vadd.f32 %v1285, %v1210
        %v1287 = vrot.slane %v1286, 4
        %v1288 = vadd.f32 %v1286, %v1287
        %v1289 = vrot.slane %v1288, 2
        %v1290 = vadd.f32 %v1288, %v1289
        %v1291 = vrot.slane %v1290, 1
        %v1292 = vadd.f32 %v1290, %v1291
        %v1293 = vadd.f32 %v1178, %v1182
        %v1294 = vadd.f32 %v1293, %v1188
        %v1295 = vadd.f32 %v1294, %v1192
        %v1296 = vadd.f32 %v1295, %v1198
        %v1297 = vadd.f32 %v1296, %v1202
        %v1298 = vadd.f32 %v1297, %v1208
        %v1299 = vadd.f32 %v1298, %v1212
        %v1300 = vrot.slane %v1299, 4
        %v1301 = vadd.f32 %v1299, %v1300
        %v1302 = vrot.slane %v1301, 2
        %v1303 = vadd.f32 %v1301, %v1302
        %v1304 = vrot.slane %v1303, 1
        %v1305 = vadd.f32 %v1303, %v1304
        %1306 = vmatprep.subr.mxu0 %v1247
        %1307 = vmatpush1.msra.mxu0 %v1246
        %1308 = vmatprep.subr.mxu0 %v1245
        %1309 = vmatpush1.msra.mxu0 %v1244
        %1310 = vmatprep.subr.mxu0 %v1243
        %1311 = vmatpush1.msra.mxu0 %v1242
        %1312 = vmatprep.subr.mxu0 %v1241
        %1313 = vmatpush1.msra.mxu0 %v1240
        %1314 = vmatprep.subr.mxu0 %v1239
        %1315 = vmatpush1.msra.mxu0 %v1238
        %1316 = vmatprep.subr.mxu0 %v1237
        %1317 = vmatpush1.msra.mxu0 %v1236
        %1318 = vmatprep.subr.mxu0 %v1235
        %1319 = vmatpush1.msra.mxu0 %v1234
        %1320 = vmatprep.subr.mxu0 %v1233
        %1321 = vmatpush1.msra.mxu0 %v1232
        %1322 = vmatprep.subr.mxu0 %v1231
        %1323 = vmatpush1.msra.mxu0 %v1230
        %1324 = vmatprep.subr.mxu0 %v1229
        %1325 = vmatpush1.msra.mxu0 %v1228
        %1326 = vmatprep.subr.mxu0 %v1227
        %1327 = vmatpush1.msra.mxu0 %v1226
        %1328 = vmatprep.subr.mxu0 %v1225
        %1329 = vmatpush1.msra.mxu0 %v1224
        %1330 = vmatprep.subr.mxu0 %v1223
        %1331 = vmatpush1.msra.mxu0 %v1222
        %1332 = vmatprep.subr.mxu0 %v1221
        %1333 = vmatpush1.msra.mxu0 %v1220
        %1334 = vmatprep.subr.mxu0 %v1219
        %1335 = vmatpush1.msra.mxu0 %v1218
        %1336 = vmatprep.subr.mxu0 %v1217
        %1337 = vmatpush1.msra.mxu0 %v1216
        %1338 = vmatprep.subr.mxu0 %v1279
        %1339 = vmatpush2.msra.mxu0 %v1278
        %1340 = vmatprep.subr.mxu0 %v1277
        %1341 = vmatpush2.msra.mxu0 %v1276
        %1342 = vmatprep.subr.mxu0 %v1275
        %1343 = vmatpush2.msra.mxu0 %v1274
        %1344 = vmatprep.subr.mxu0 %v1273
        %1345 = vmatpush2.msra.mxu0 %v1272
        %1346 = vmatprep.subr.mxu0 %v1271
        %1347 = vmatpush2.msra.mxu0 %v1270
        %1348 = vmatprep.subr.mxu0 %v1269
        %1349 = vmatpush2.msra.mxu0 %v1268
        %1350 = vmatprep.subr.mxu0 %v1267
        %1351 = vmatpush2.msra.mxu0 %v1266
        %1352 = vmatprep.subr.mxu0 %v1265
        %1353 = vmatpush2.msra.mxu0 %v1264
        %1354 = vmatprep.subr.mxu0 %v1263
        %1355 = vmatpush2.msra.mxu0 %v1262
        %1356 = vmatprep.subr.mxu0 %v1261
        %1357 = vmatpush2.msra.mxu0 %v1260
        %1358 = vmatprep.subr.mxu0 %v1259
        %1359 = vmatpush2.msra.mxu0 %v1258
        %1360 = vmatprep.subr.mxu0 %v1257
        %1361 = vmatpush2.msra.mxu0 %v1256
        %1362 = vmatprep.subr.mxu0 %v1255
        %1363 = vmatpush2.msra.mxu0 %v1254
        %1364 = vmatprep.subr.mxu0 %v1253
        %1365 = vmatpush2.msra.mxu0 %v1252
        %1366 = vmatprep.subr.mxu0 %v1251
        %1367 = vmatpush2.msra.mxu0 %v1250
        %1368 = vmatprep.subr.mxu0 %v1249
        %1369 = vmatpush2.msra.mxu0 %v1248
        %1370 = vmatprep.mubr.f32.mxu0 %v1305
        %1371 = vmatmul.mubr.f32.gmra.mxu0 %v1292
        %v1372 = vpop.f32.mrf.mxu0
        %v1373 = vadd.f32 0.0, %v1372
        %v1374 = vpop.f32.mrf.mxu0
        %v1375 = vadd.f32 0.0, %v1374
        %1376 = vdwg.mxu0
        %v1377 = vmul.f32 %v1373, 0.015625
        %v1378 = vmul.f32 %v1375, 0.015625
        %v1379 = vlaneseq
        %v1380 = vshrl.u32 %v1379, 7
        %v1381 = vsub.s32 0, %v1380
        %v1382 = vrot.slane %v1377, %v1381
        %v1383 = vlaneseq
        %v1384 = vshrl.u32 %v1383, 7
        %v1385 = vsub.s32 0, %v1384
        %v1386 = vrot.slane %v1378, %v1385
        %v1387 = vsub.f32 %v1176, %v1382
        %v1388 = vsub.f32 %v1178, %v1386
        %v1389 = vsub.f32 %v1180, %v1382
        %v1390 = vsub.f32 %v1182, %v1386
        %v1391 = vsub.f32 %v1186, %v1382
        %v1392 = vsub.f32 %v1188, %v1386
        %v1393 = vsub.f32 %v1190, %v1382
        %v1394 = vsub.f32 %v1192, %v1386
        %v1395 = vsub.f32 %v1196, %v1382
        %v1396 = vsub.f32 %v1198, %v1386
        %v1397 = vsub.f32 %v1200, %v1382
        %v1398 = vsub.f32 %v1202, %v1386
        %v1399 = vsub.f32 %v1206, %v1382
        %v1400 = vsub.f32 %v1208, %v1386
        %v1401 = vsub.f32 %v1210, %v1382
        %v1402 = vsub.f32 %v1212, %v1386
        %v1403 = vmul.f32 %v1387, %v1387
        %v1404 = vmul.f32 %v1388, %v1388
        %v1405 = vmul.f32 %v1389, %v1389
        %v1406 = vmul.f32 %v1390, %v1390
        %v1407 = vmul.f32 %v1391, %v1391
        %v1408 = vmul.f32 %v1392, %v1392
        %v1409 = vmul.f32 %v1393, %v1393
        %v1410 = vmul.f32 %v1394, %v1394
        %v1411 = vmul.f32 %v1395, %v1395
        %v1412 = vmul.f32 %v1396, %v1396
        %v1413 = vmul.f32 %v1397, %v1397
        %v1414 = vmul.f32 %v1398, %v1398
        %v1415 = vmul.f32 %v1399, %v1399
        %v1416 = vmul.f32 %v1400, %v1400
        %v1417 = vmul.f32 %v1401, %v1401
        %v1418 = vmul.f32 %v1402, %v1402
        %v1419 = vadd.f32 %v1403, %v1405
        %v1420 = vadd.f32 %v1419, %v1407
        %v1421 = vadd.f32 %v1420, %v1409
        %v1422 = vadd.f32 %v1421, %v1411
        %v1423 = vadd.f32 %v1422, %v1413
        %v1424 = vadd.f32 %v1423, %v1415
        %v1425 = vadd.f32 %v1424, %v1417
        %v1426 = vrot.slane %v1425, 4
        %v1427 = vadd.f32 %v1425, %v1426
        %v1428 = vrot.slane %v1427, 2
        %v1429 = vadd.f32 %v1427, %v1428
        %v1430 = vrot.slane %v1429, 1
        %v1431 = vadd.f32 %v1429, %v1430
        %v1432 = vadd.f32 %v1404, %v1406
        %v1433 = vadd.f32 %v1432, %v1408
        %v1434 = vadd.f32 %v1433, %v1410
        %v1435 = vadd.f32 %v1434, %v1412
        %v1436 = vadd.f32 %v1435, %v1414
        %v1437 = vadd.f32 %v1436, %v1416
        %v1438 = vadd.f32 %v1437, %v1418
        %v1439 = vrot.slane %v1438, 4
        %v1440 = vadd.f32 %v1438, %v1439
        %v1441 = vrot.slane %v1440, 2
        %v1442 = vadd.f32 %v1440, %v1441
        %v1443 = vrot.slane %v1442, 1
        %v1444 = vadd.f32 %v1442, %v1443
        %1445 = vmatprep.subr.mxu0 %v1247
        %1446 = vmatpush1.msra.mxu0 %v1246
        %1447 = vmatprep.subr.mxu0 %v1245
        %1448 = vmatpush1.msra.mxu0 %v1244
        %1449 = vmatprep.subr.mxu0 %v1243
        %1450 = vmatpush1.msra.mxu0 %v1242
        %1451 = vmatprep.subr.mxu0 %v1241
        %1452 = vmatpush1.msra.mxu0 %v1240
        %1453 = vmatprep.subr.mxu0 %v1239
        %1454 = vmatpush1.msra.mxu0 %v1238
        %1455 = vmatprep.subr.mxu0 %v1237
        %1456 = vmatpush1.msra.mxu0 %v1236
        %1457 = vmatprep.subr.mxu0 %v1235
        %1458 = vmatpush1.msra.mxu0 %v1234
        %1459 = vmatprep.subr.mxu0 %v1233
        %1460 = vmatpush1.msra.mxu0 %v1232
        %1461 = vmatprep.subr.mxu0 %v1231
        %1462 = vmatpush1.msra.mxu0 %v1230
        %1463 = vmatprep.subr.mxu0 %v1229
        %1464 = vmatpush1.msra.mxu0 %v1228
        %1465 = vmatprep.subr.mxu0 %v1227
        %1466 = vmatpush1.msra.mxu0 %v1226
        %1467 = vmatprep.subr.mxu0 %v1225
        %1468 = vmatpush1.msra.mxu0 %v1224
        %1469 = vmatprep.subr.mxu0 %v1223
        %1470 = vmatpush1.msra.mxu0 %v1222
        %1471 = vmatprep.subr.mxu0 %v1221
        %1472 = vmatpush1.msra.mxu0 %v1220
        %1473 = vmatprep.subr.mxu0 %v1219
        %1474 = vmatpush1.msra.mxu0 %v1218
        %1475 = vmatprep.subr.mxu0 %v1217
        %1476 = vmatpush1.msra.mxu0 %v1216
        %1477 = vmatprep.subr.mxu0 %v1279
        %1478 = vmatpush2.msra.mxu0 %v1278
        %1479 = vmatprep.subr.mxu0 %v1277
        %1480 = vmatpush2.msra.mxu0 %v1276
        %1481 = vmatprep.subr.mxu0 %v1275
        %1482 = vmatpush2.msra.mxu0 %v1274
        %1483 = vmatprep.subr.mxu0 %v1273
        %1484 = vmatpush2.msra.mxu0 %v1272
        %1485 = vmatprep.subr.mxu0 %v1271
        %1486 = vmatpush2.msra.mxu0 %v1270
        %1487 = vmatprep.subr.mxu0 %v1269
        %1488 = vmatpush2.msra.mxu0 %v1268
        %1489 = vmatprep.subr.mxu0 %v1267
        %1490 = vmatpush2.msra.mxu0 %v1266
        %1491 = vmatprep.subr.mxu0 %v1265
        %1492 = vmatpush2.msra.mxu0 %v1264
        %1493 = vmatprep.subr.mxu0 %v1263
        %1494 = vmatpush2.msra.mxu0 %v1262
        %1495 = vmatprep.subr.mxu0 %v1261
        %1496 = vmatpush2.msra.mxu0 %v1260
        %1497 = vmatprep.subr.mxu0 %v1259
        %1498 = vmatpush2.msra.mxu0 %v1258
        %1499 = vmatprep.subr.mxu0 %v1257
        %1500 = vmatpush2.msra.mxu0 %v1256
        %1501 = vmatprep.subr.mxu0 %v1255
        %1502 = vmatpush2.msra.mxu0 %v1254
        %1503 = vmatprep.subr.mxu0 %v1253
        %1504 = vmatpush2.msra.mxu0 %v1252
        %1505 = vmatprep.subr.mxu0 %v1251
        %1506 = vmatpush2.msra.mxu0 %v1250
        %1507 = vmatprep.subr.mxu0 %v1249
        %1508 = vmatpush2.msra.mxu0 %v1248
        %1509 = vmatprep.mubr.f32.mxu0 %v1444
        %1510 = vmatmul.mubr.f32.gmra.mxu0 %v1431
        %v1511 = vpop.f32.mrf.mxu0
        %v1512 = vadd.f32 0.0, %v1511
        %v1513 = vpop.f32.mrf.mxu0
        %v1514 = vadd.f32 0.0, %v1513
        %1515 = vdwg.mxu0
        %v1516 = vmul.f32 %v1512, 0.015625
        %v1517 = vmul.f32 %v1514, 0.015625
        %v1518 = vadd.f32 %v1516, 1e-05
        %v1519 = vadd.f32 %v1517, 1e-05
        %v1520 = vrsqrt.pop %v1518
        %v1521 = vrsqrt.pop %v1519
        %v1522 = vlaneseq
        %v1523 = vshrl.u32 %v1522, 7
        %v1524 = vsub.s32 0, %v1523
        %v1525 = vrot.slane %v1520, %v1524
        %v1526 = vlaneseq
        %v1527 = vshrl.u32 %v1526, 7
        %v1528 = vsub.s32 0, %v1527
        %v1529 = vrot.slane %v1521, %v1528
        %v1530 = vmul.f32 %v1387, %v1525
        %v1531 = vmul.f32 %v1388, %v1529
        %v1532 = vmul.f32 %v1389, %v1525
        %v1533 = vmul.f32 %v1390, %v1529
        %v1534 = vmul.f32 %v1391, %v1525
        %v1535 = vmul.f32 %v1392, %v1529
        %v1536 = vmul.f32 %v1393, %v1525
        %v1537 = vmul.f32 %v1394, %v1529
        %v1538 = vmul.f32 %v1395, %v1525
        %v1539 = vmul.f32 %v1396, %v1529
        %v1540 = vmul.f32 %v1397, %v1525
        %v1541 = vmul.f32 %v1398, %v1529
        %v1542 = vmul.f32 %v1399, %v1525
        %v1543 = vmul.f32 %v1400, %v1529
        %v1544 = vmul.f32 %v1401, %v1525
        %v1545 = vmul.f32 %v1402, %v1529
        %v1547 = vlaneseq
        %v1548 = vshrl.u32 %v1547, 7
        %v1549 = vsub.s32 0, %v1548
        %v1550 = vrot.slane %v1214, %v1549
        %v1551 = vlaneseq
        %v1552 = vshrl.u32 %v1551, 7
        %v1553 = vsub.s32 1, %v1552
        %v1554 = vrot.slane %v1214, %v1553
        %v1557 = vmul.f32 %v1530, %v1550
        %v1558 = vmul.f32 %v1531, %v1554
        %v1559 = vmul.f32 %v1532, %v1550
        %v1560 = vmul.f32 %v1533, %v1554
        %v1561 = vmul.f32 %v1534, %v1550
        %v1562 = vmul.f32 %v1535, %v1554
        %v1563 = vmul.f32 %v1536, %v1550
        %v1564 = vmul.f32 %v1537, %v1554
        %v1565 = vmul.f32 %v1538, %v1550
        %v1566 = vmul.f32 %v1539, %v1554
        %v1567 = vmul.f32 %v1540, %v1550
        %v1568 = vmul.f32 %v1541, %v1554
        %v1569 = vmul.f32 %v1542, %v1550
        %v1570 = vmul.f32 %v1543, %v1554
        %v1571 = vmul.f32 %v1544, %v1550
        %v1572 = vmul.f32 %v1545, %v1554
        %v1574 = vlaneseq
        %v1575 = vshrl.u32 %v1574, 7
        %v1576 = vsub.s32 0, %v1575
        %v1577 = vrot.slane %v1215, %v1576
        %v1578 = vlaneseq
        %v1579 = vshrl.u32 %v1578, 7
        %v1580 = vsub.s32 1, %v1579
        %v1581 = vrot.slane %v1215, %v1580
        %v1584 = vadd.f32 %v1557, %v1577
        %v1585 = vadd.f32 %v1558, %v1581
        %v1586 = vadd.f32 %v1559, %v1577
        %v1587 = vadd.f32 %v1560, %v1581
        %v1588 = vadd.f32 %v1561, %v1577
        %v1589 = vadd.f32 %v1562, %v1581
        %v1590 = vadd.f32 %v1563, %v1577
        %v1591 = vadd.f32 %v1564, %v1581
        %v1592 = vadd.f32 %v1565, %v1577
        %v1593 = vadd.f32 %v1566, %v1581
        %v1594 = vadd.f32 %v1567, %v1577
        %v1595 = vadd.f32 %v1568, %v1581
        %v1596 = vadd.f32 %v1569, %v1577
        %v1597 = vadd.f32 %v1570, %v1581
        %v1598 = vadd.f32 %v1571, %v1577
        %v1599 = vadd.f32 %v1572, %v1581
        %v1600 = vxor.u32 %v1584, 2147483648
        %v1601 = vxor.u32 %v1585, 2147483648
        %v1602 = vxor.u32 %v1586, 2147483648
        %v1603 = vxor.u32 %v1587, 2147483648
        %v1604 = vxor.u32 %v1588, 2147483648
        %v1605 = vxor.u32 %v1589, 2147483648
        %v1606 = vxor.u32 %v1590, 2147483648
        %v1607 = vxor.u32 %v1591, 2147483648
        %v1608 = vxor.u32 %v1592, 2147483648
        %v1609 = vxor.u32 %v1593, 2147483648
        %v1610 = vxor.u32 %v1594, 2147483648
        %v1611 = vxor.u32 %v1595, 2147483648
        %v1612 = vxor.u32 %v1596, 2147483648
        %v1613 = vxor.u32 %v1597, 2147483648
        %v1614 = vxor.u32 %v1598, 2147483648
        %v1615 = vxor.u32 %v1599, 2147483648
        %v1616 = vmul.f32 %v1600, 1.442695
        %v1617 = vpow.pop %v1616
        %v1618 = vmul.f32 %v1601, 1.442695
        %v1619 = vpow.pop %v1618
        %v1620 = vmul.f32 %v1602, 1.442695
        %v1621 = vpow.pop %v1620
        %v1622 = vmul.f32 %v1603, 1.442695
        %v1623 = vpow.pop %v1622
        %v1624 = vmul.f32 %v1604, 1.442695
        %v1625 = vpow.pop %v1624
        %v1626 = vmul.f32 %v1605, 1.442695
        %v1627 = vpow.pop %v1626
        %v1628 = vmul.f32 %v1606, 1.442695
        %v1629 = vpow.pop %v1628
        %v1630 = vmul.f32 %v1607, 1.442695
        %v1631 = vpow.pop %v1630
        %v1632 = vmul.f32 %v1608, 1.442695
        %v1633 = vpow.pop %v1632
        %v1634 = vmul.f32 %v1609, 1.442695
        %v1635 = vpow.pop %v1634
        %v1636 = vmul.f32 %v1610, 1.442695
        %v1637 = vpow.pop %v1636
        %v1638 = vmul.f32 %v1611, 1.442695
        %v1639 = vpow.pop %v1638
        %v1640 = vmul.f32 %v1612, 1.442695
        %v1641 = vpow.pop %v1640
        %v1642 = vmul.f32 %v1613, 1.442695
        %v1643 = vpow.pop %v1642
        %v1644 = vmul.f32 %v1614, 1.442695
        %v1645 = vpow.pop %v1644
        %v1646 = vmul.f32 %v1615, 1.442695
        %v1647 = vpow.pop %v1646
        %v1648 = vadd.f32 %v1617, 1.0
        %v1649 = vadd.f32 %v1619, 1.0
        %v1650 = vadd.f32 %v1621, 1.0
        %v1651 = vadd.f32 %v1623, 1.0
        %v1652 = vadd.f32 %v1625, 1.0
        %v1653 = vadd.f32 %v1627, 1.0
        %v1654 = vadd.f32 %v1629, 1.0
        %v1655 = vadd.f32 %v1631, 1.0
        %v1656 = vadd.f32 %v1633, 1.0
        %v1657 = vadd.f32 %v1635, 1.0
        %v1658 = vadd.f32 %v1637, 1.0
        %v1659 = vadd.f32 %v1639, 1.0
        %v1660 = vadd.f32 %v1641, 1.0
        %v1661 = vadd.f32 %v1643, 1.0
        %v1662 = vadd.f32 %v1645, 1.0
        %v1663 = vadd.f32 %v1647, 1.0
        %v1664 = vrcp.pop %v1648
        %v1665 = vmul.f32 1.0, %v1664
        %v1666 = vrcp.pop %v1649
        %v1667 = vmul.f32 1.0, %v1666
        %v1668 = vrcp.pop %v1650
        %v1669 = vmul.f32 1.0, %v1668
        %v1670 = vrcp.pop %v1651
        %v1671 = vmul.f32 1.0, %v1670
        %v1672 = vrcp.pop %v1652
        %v1673 = vmul.f32 1.0, %v1672
        %v1674 = vrcp.pop %v1653
        %v1675 = vmul.f32 1.0, %v1674
        %v1676 = vrcp.pop %v1654
        %v1677 = vmul.f32 1.0, %v1676
        %v1678 = vrcp.pop %v1655
        %v1679 = vmul.f32 1.0, %v1678
        %v1680 = vrcp.pop %v1656
        %v1681 = vmul.f32 1.0, %v1680
        %v1682 = vrcp.pop %v1657
        %v1683 = vmul.f32 1.0, %v1682
        %v1684 = vrcp.pop %v1658
        %v1685 = vmul.f32 1.0, %v1684
        %v1686 = vrcp.pop %v1659
        %v1687 = vmul.f32 1.0, %v1686
        %v1688 = vrcp.pop %v1660
        %v1689 = vmul.f32 1.0, %v1688
        %v1690 = vrcp.pop %v1661
        %v1691 = vmul.f32 1.0, %v1690
        %v1692 = vrcp.pop %v1662
        %v1693 = vmul.f32 1.0, %v1692
        %v1694 = vrcp.pop %v1663
        %v1695 = vmul.f32 1.0, %v1694
        %v1696 = vmul.f32 %v1584, %v1665
        %v1697 = vmul.f32 %v1585, %v1667
        %v1698 = vmul.f32 %v1586, %v1669
        %v1699 = vmul.f32 %v1587, %v1671
        %v1700 = vmul.f32 %v1588, %v1673
        %v1701 = vmul.f32 %v1589, %v1675
        %v1702 = vmul.f32 %v1590, %v1677
        %v1703 = vmul.f32 %v1591, %v1679
        %v1704 = vmul.f32 %v1592, %v1681
        %v1705 = vmul.f32 %v1593, %v1683
        %v1706 = vmul.f32 %v1594, %v1685
        %v1707 = vmul.f32 %v1595, %v1687
        %v1708 = vmul.f32 %v1596, %v1689
        %v1709 = vmul.f32 %v1597, %v1691
        %v1710 = vmul.f32 %v1598, %v1693
        %v1711 = vmul.f32 %v1599, %v1695
        %v1712 = vadd.f32 %v1696, %v1698
        %v1713 = vadd.f32 %v1712, %v1700
        %v1714 = vadd.f32 %v1713, %v1702
        %v1715 = vadd.f32 %v1714, %v1704
        %v1716 = vadd.f32 %v1715, %v1706
        %v1717 = vadd.f32 %v1716, %v1708
        %v1718 = vadd.f32 %v1717, %v1710
        %v1719 = vrot.slane %v1718, 4
        %v1720 = vadd.f32 %v1718, %v1719
        %v1721 = vrot.slane %v1720, 2
        %v1722 = vadd.f32 %v1720, %v1721
        %v1723 = vrot.slane %v1722, 1
        %v1724 = vadd.f32 %v1722, %v1723
        %v1725 = vadd.f32 %v1697, %v1699
        %v1726 = vadd.f32 %v1725, %v1701
        %v1727 = vadd.f32 %v1726, %v1703
        %v1728 = vadd.f32 %v1727, %v1705
        %v1729 = vadd.f32 %v1728, %v1707
        %v1730 = vadd.f32 %v1729, %v1709
        %v1731 = vadd.f32 %v1730, %v1711
        %v1732 = vrot.slane %v1731, 4
        %v1733 = vadd.f32 %v1731, %v1732
        %v1734 = vrot.slane %v1733, 2
        %v1735 = vadd.f32 %v1733, %v1734
        %v1736 = vrot.slane %v1735, 1
        %v1737 = vadd.f32 %v1735, %v1736
        %v1738 = vrcp.pop 64.0
        %v1739 = vmul.f32 %v1724, %v1738
        %v1740 = vmul.f32 %v1737, %v1738
        %v1741 = vpack.c.bf16 %v1739, %v1739
        %v1742 = vpack.c.bf16 %v1740, %v1740
        %v1743 = vld [vmem:[#allocation14] sm:$0xf]
        %v1744 = vld [vmem:[#allocation14 + $0x4] sm:$0xf]
        %v1745 = vld [vmem:[#allocation14 + $0x8] sm:$0xf]
        %v1746 = vld [vmem:[#allocation14 + $0xc] sm:$0xf]
        %v1747 = vld [vmem:[#allocation14 + $0x10] sm:$0xf]
        %v1748 = vld [vmem:[#allocation14 + $0x14] sm:$0xf]
        %v1749 = vld [vmem:[#allocation14 + $0x18] sm:$0xf]
        %v1750 = vld [vmem:[#allocation14 + $0x1c] sm:$0xf]
        %v1751 = vld [vmem:[#allocation14 + $0x20] sm:$0xf]
        %v1752 = vld [vmem:[#allocation14 + $0x24] sm:$0xf]
        %v1753 = vld [vmem:[#allocation14 + $0x28] sm:$0xf]
        %v1754 = vld [vmem:[#allocation14 + $0x2c] sm:$0xf]
        %v1755 = vld [vmem:[#allocation14 + $0x30] sm:$0xf]
        %v1756 = vld [vmem:[#allocation14 + $0x34] sm:$0xf]
        %v1757 = vld [vmem:[#allocation14 + $0x38] sm:$0xf]
        %v1758 = vld [vmem:[#allocation14 + $0x3c] sm:$0xf]
        %v1759 = vld [vmem:[#allocation14 + $0x40] sm:$0xf]
        %v1760 = vld [vmem:[#allocation14 + $0x44] sm:$0xf]
        %v1761 = vld [vmem:[#allocation14 + $0x48] sm:$0xf]
        %v1762 = vld [vmem:[#allocation14 + $0x4c] sm:$0xf]
        %v1763 = vld [vmem:[#allocation14 + $0x50] sm:$0xf]
        %v1764 = vld [vmem:[#allocation14 + $0x54] sm:$0xf]
        %v1765 = vld [vmem:[#allocation14 + $0x58] sm:$0xf]
        %v1766 = vld [vmem:[#allocation14 + $0x5c] sm:$0xf]
        %v1767 = vld [vmem:[#allocation14 + $0x60] sm:$0xf]
        %v1768 = vld [vmem:[#allocation14 + $0x64] sm:$0xf]
        %v1769 = vld [vmem:[#allocation14 + $0x68] sm:$0xf]
        %v1770 = vld [vmem:[#allocation14 + $0x6c] sm:$0xf]
        %v1771 = vld [vmem:[#allocation14 + $0x70] sm:$0xf]
        %v1772 = vld [vmem:[#allocation14 + $0x74] sm:$0xf]
        %v1773 = vld [vmem:[#allocation14 + $0x78] sm:$0xf]
        %v1774 = vld [vmem:[#allocation14 + $0x7c] sm:$0xf]
        %v1775 = vld [vmem:[%s12] sm:$0x1]
        %v1808 = vunpack.c.l.b16 %v1743
        %v1809 = vunpack.c.l.b16 %v1744
        %v1810 = vunpack.c.l.b16 %v1745
        %v1811 = vunpack.c.l.b16 %v1746
        %v1812 = vunpack.c.l.b16 %v1747
        %v1813 = vunpack.c.l.b16 %v1748
        %v1814 = vunpack.c.l.b16 %v1749
        %v1815 = vunpack.c.l.b16 %v1750
        %v1816 = vunpack.c.l.b16 %v1751
        %v1817 = vunpack.c.l.b16 %v1752
        %v1818 = vunpack.c.l.b16 %v1753
        %v1819 = vunpack.c.l.b16 %v1754
        %v1820 = vunpack.c.l.b16 %v1755
        %v1821 = vunpack.c.l.b16 %v1756
        %v1822 = vunpack.c.l.b16 %v1757
        %v1823 = vunpack.c.l.b16 %v1758
        %v1824 = vunpack.c.l.b16 %v1759
        %v1825 = vunpack.c.l.b16 %v1760
        %v1826 = vunpack.c.l.b16 %v1761
        %v1827 = vunpack.c.l.b16 %v1762
        %v1828 = vunpack.c.l.b16 %v1763
        %v1829 = vunpack.c.l.b16 %v1764
        %v1830 = vunpack.c.l.b16 %v1765
        %v1831 = vunpack.c.l.b16 %v1766
        %v1832 = vunpack.c.l.b16 %v1767
        %v1833 = vunpack.c.l.b16 %v1768
        %v1834 = vunpack.c.l.b16 %v1769
        %v1835 = vunpack.c.l.b16 %v1770
        %v1836 = vunpack.c.l.b16 %v1771
        %v1837 = vunpack.c.l.b16 %v1772
        %v1838 = vunpack.c.l.b16 %v1773
        %v1839 = vunpack.c.l.b16 %v1774
        %v1840 = vpack.c.b16 %v1809, %v1808
        %v1841 = vpack.c.b16 %v1811, %v1810
        %v1842 = vpack.c.b16 %v1813, %v1812
        %v1843 = vpack.c.b16 %v1815, %v1814
        %v1844 = vpack.c.b16 %v1817, %v1816
        %v1845 = vpack.c.b16 %v1819, %v1818
        %v1846 = vpack.c.b16 %v1821, %v1820
        %v1847 = vpack.c.b16 %v1823, %v1822
        %v1848 = vpack.c.b16 %v1825, %v1824
        %v1849 = vpack.c.b16 %v1827, %v1826
        %v1850 = vpack.c.b16 %v1829, %v1828
        %v1851 = vpack.c.b16 %v1831, %v1830
        %v1852 = vpack.c.b16 %v1833, %v1832
        %v1853 = vpack.c.b16 %v1835, %v1834
        %v1854 = vpack.c.b16 %v1837, %v1836
        %v1855 = vpack.c.b16 %v1839, %v1838
        %1872 = vmatprep.subr.bf16.mxu0 0
        %1873 = vmatpush1.bf16.msra.mxu0 %v1847
        %1874 = vmatprep.subr.bf16.mxu0 0
        %1875 = vmatpush1.bf16.msra.mxu0 %v1846
        %1876 = vmatprep.subr.bf16.mxu0 0
        %1877 = vmatpush1.bf16.msra.mxu0 %v1845
        %1878 = vmatprep.subr.bf16.mxu0 0
        %1879 = vmatpush1.bf16.msra.mxu0 %v1844
        %1880 = vmatprep.subr.bf16.mxu0 0
        %1881 = vmatpush1.bf16.msra.mxu0 %v1843
        %1882 = vmatprep.subr.bf16.mxu0 0
        %1883 = vmatpush1.bf16.msra.mxu0 %v1842
        %1884 = vmatprep.subr.bf16.mxu0 0
        %1885 = vmatpush1.bf16.msra.mxu0 %v1841
        %1886 = vmatprep.subr.bf16.mxu0 0
        %1887 = vmatpush1.bf16.msra.mxu0 %v1840
        %1888 = vmatprep.subr.bf16.mxu0 0
        %1889 = vmatpush2.bf16.msra.mxu0 %v1855
        %1890 = vmatprep.subr.bf16.mxu0 0
        %1891 = vmatpush2.bf16.msra.mxu0 %v1854
        %1892 = vmatprep.subr.bf16.mxu0 0
        %1893 = vmatpush2.bf16.msra.mxu0 %v1853
        %1894 = vmatprep.subr.bf16.mxu0 0
        %1895 = vmatpush2.bf16.msra.mxu0 %v1852
        %1896 = vmatprep.subr.bf16.mxu0 0
        %1897 = vmatpush2.bf16.msra.mxu0 %v1851
        %1898 = vmatprep.subr.bf16.mxu0 0
        %1899 = vmatpush2.bf16.msra.mxu0 %v1850
        %1900 = vmatprep.subr.bf16.mxu0 0
        %1901 = vmatpush2.bf16.msra.mxu0 %v1849
        %1902 = vmatprep.subr.bf16.mxu0 0
        %1903 = vmatpush2.bf16.msra.mxu0 %v1848
        %1904 = vmatprep.mubr.bf16.mxu0 %v1742
        %1905 = vmatmul.mubr.bf16.gmra.mxu0 %v1741
        %v1906 = vpop.f32.mrf.mxu0
        %v1907 = vadd.f32 %v1775, %v1906
        %v1908 = vpop.f32.mrf.mxu0
        %v1909 = vpop.f32.mrf.mxu0
        %v1910 = vpop.f32.mrf.mxu0
        %1911 = vdwg.mxu0
        %1912 = vst [vmem:[%s555] sm:$0x1] %v1907
        %s1913 = sand.u32 %s320, 1
        %s1914 = scalar_lea.sflag [#allocation4], %s1913
        %s1915 = sand.u32 %s320, 1
        %s1916 = scalar_lea.vmem [#allocation16], %s1915
        // Predicated region
        $region105: #{tpu_custom_call.1} parent=71 // pred_check
          %p1917 = pneg %p330
        $region106: #{tpu_custom_call.1} parent=71 // pred_check_branch
          %1919 = sbr.rel (%p1917) target = $region108
        $region107: #{tpu_custom_call.1} parent=71 // pred_region
          %s1921 = ssub.s32 16, 16
          %1922 = vsyncadd %s1914, %s1921
          %s1923 = smul.addr %s34, 16
          %s1924 = scalar_lea.hbm %s13, %s1923
          %s1926 = sshll.u32 %s1916, 4
          %s1927 = int_to_ptr.vmem [resolvable:$true] %s1926
          %1929 = dma.vmem_to_hbm [thread:$0]  %s1927, 16, %s1924, %s1914
        $region108: #{tpu_custom_call.1} parent=71 // pred_fallthru
          _
      $region72: #{tpu_custom_call.1} parent=5 // pred_fallthru
        _
      %p1930 = scmp.le.s32.totalorder 2, %s29
      // Predicated region
      $region109: #{tpu_custom_call.1} parent=5 // pred_check
        %p1931 = pneg %p1930
      $region110: #{tpu_custom_call.1} parent=5 // pred_check_branch
        %1933 = sbr.rel (%p1931) target = $region112
      $region111: #{tpu_custom_call.1} parent=5 // pred_region
        %s1934 = ssub.s32 %s29, 2
        // Predicated region
        $region113: #{tpu_custom_call.1} parent=111 // pred_check
          %p1935 = pneg %p336
        $region114: #{tpu_custom_call.1} parent=111 // pred_check_branch
          %1937 = sbr.rel (%p1935) target = $region116
        $region115: #{tpu_custom_call.1} parent=111 // pred_region
          %s1938 = sand.u32 %s321, 1
          %s1939 = scalar_lea.sflag [#allocation4], %s1938
          %s1940 = sand.u32 %s321, 1
          %s1941 = scalar_lea.vmem [#allocation16], %s1940
          %1942 = dma.done %s1939, 16
        $region116: #{tpu_custom_call.1} parent=111 // pred_fallthru
          _
      $region112: #{tpu_custom_call.1} parent=5 // pred_fallthru
        _
    $region6: #{tpu_custom_call.1} parent=1 // loop_footer
      %s33 = sadd.s32 1, %s29
    $region7: #{tpu_custom_call.1} parent=1 // loop_footer_branch
      %28 = sbr.rel target = $region3
    $region8: #{tpu_custom_call.1} parent=1 // loop_exit
      _
    %1943 = vsyncpa [#allocation3], 1
    %s1944 = scalar_lea.sflag [#allocation3], 1
    %1945 = vsyncpa %s1944, 1
    %1946 = vsyncpa [#allocation6], 1
    %1947 = vsyncpa [#allocation9], 1
    %1948 = vsyncpa [#allocation12], 1
    %1949 = vsyncpa [#allocation15], 1
    %1950 = vsyncpa [#allocation4], 1
    %s1951 = scalar_lea.sflag [#allocation4], 1
    %1952 = vsyncpa %s1951, 1

</llo_original>
